<compile_context>
chip_gen: v7x
topology: tpu7x:2x2x1
jax: 0.10.0
libtpu: 0.0.40
codegen_flags: <defaults>
</compile_context>

<pallas_src>
import functools

import jax
import jax.numpy as jnp
import numpy as np
from jax.experimental import pallas as pl
from jax.experimental.pallas import tpu as pltpu

MIN_NORM = 1e-15
PROJ_EPS = 4e-3          # float32 eps used by HGCN PoincareBall.proj
ARTANH_CLAMP = 1e-7      # float32-safe clamp for artanh argument


def _round_up(x, m):
    return ((x + m - 1) // m) * m


def _artanh(x):
    x = jnp.clip(x, -1.0 + ARTANH_CLAMP, 1.0 - ARTANH_CLAMP)
    return 0.5 * jnp.log((1.0 + x) / (1.0 - x))


def _sigmoid_bf16(x_f32):
    # sigmoid(x) = 0.5*tanh(0.5*x) + 0.5  -> single EUP push; bf16 EUP on v6e/v7x.
    xh = (x_f32 * 0.5).astype(jnp.bfloat16)
    return jnp.tanh(xh) * 0.5 + 0.5           # stays bf16 (weak-typed constants)


# --------------------------------------------------------------------------------------
# Prologue (O(N*D), tiled over row blocks): logmap0 + DenseAtt score vectors, biases folded.
# --------------------------------------------------------------------------------------
def _prologue_kernel(x_ref, w_ref, b_ref,
                     xt_ref, lpar_ref, rpar_ref, lchi_ref, rchi_ref, *, c):
    # x_ref: (TP, D) f32, w_ref: (4, D) f32 rows = [w_par_l, w_par_r, w_chi_l, w_chi_r]
    # b_ref: (2,) f32 in SMEM = [b_par, b_chi]
    x = x_ref[...]
    w = w_ref[...]
    sqrt_c = c ** 0.5

    # ---- logmap0 (PoincareBall), exact divides (off the hot path) ----
    x_norm = jnp.maximum(jnp.sqrt(jnp.sum(x * x, axis=-1, keepdims=True)), MIN_NORM)
    scale = _artanh(sqrt_c * x_norm) / (sqrt_c * x_norm)
    x_t = scale * x                                                   # (TP, D) f32
    xt_ref[...] = x_t.astype(jnp.bfloat16)

    # ---- DenseAtt score vectors (once, biases folded in) ----
    col = jnp.einsum('nd,kd->nk', x_t, w,
                     preferred_element_type=jnp.float32)              # (TP, 4)
    row = jnp.einsum('kd,nd->kn', w, x_t,
                     preferred_element_type=jnp.float32)              # (4, TP)
    lpar_ref[...] = col[:, 0:1] + b_ref[0]    # (TP, 1)  w_par_l . x_t[i] + b_par
    rchi_ref[...] = col[:, 3:4]               # (TP, 1)  w_chi_r . x_t[j]
    rpar_ref[...] = row[1:2, :]               # (1, TP)  w_par_r . x_t[j]
    lchi_ref[...] = row[2:3, :] + b_ref[1]    # (1, TP)  w_chi_l . x_t[i] + b_chi


# --------------------------------------------------------------------------------------
# Main kernel: one (TM, TM) adjacency block per grid step feeds BOTH heads.
# --------------------------------------------------------------------------------------
def _agg_kernel(lpar_ref, rpar_ref, lchi_ref, rchi_ref, xta_ref, xtb_ref,
                adj_ref, out_ref, acc_ref, *, c):
    # lpar_ref: (TM, 1) f32   parent left scores (+b_par) for row block a
    # rpar_ref: (1, TM) f32   parent right scores for col block b
    # lchi_ref: (1, TM) f32   child left scores (+b_chi) for col block b (child output rows)
    # rchi_ref: (TM, 1) f32   child right scores for row block a (child source rows)
    # xta_ref:  (TM, D) bf16  tangent features for row block a (child source)
    # xtb_ref:  (TM, D) bf16  tangent features for col block b (parent source)
    # adj_ref:  (TM, TM) bf16 adj[a_blk, b_blk]  -- read ONCE, used by both heads
    # out_ref:  (Np, D) f32   resident output, written only at the last step
    # acc_ref:  (nA, TM, D) f32 resident accumulator scratch
    a = pl.program_id(0)
    b = pl.program_id(1)
    na = pl.num_programs(0)
    nb = pl.num_programs(1)

    @pl.when(jnp.logical_and(a == 0, b == 0))
    def _():
        acc_ref[...] = jnp.zeros_like(acc_ref)

    adj_blk = adj_ref[...]                                             # (TM, TM) bf16

    # parent head: att_par[a_i, b_j] = sigmoid(lpar[a_i] + rpar[b_j]) * adj[a_i, b_j]
    att_par = _sigmoid_bf16(lpar_ref[...] + rpar_ref[...]) * adj_blk   # (TM, TM) bf16
    # child head in adj orientation:
    #   att_chi[a_i, b_j] = sigmoid(lchi[b_j] + rchi[a_i]) * adj[a_i, b_j]
    att_chi = _sigmoid_bf16(rchi_ref[...] + lchi_ref[...]) * adj_blk   # (TM, TM) bf16

    # parent contribution -> output rows of block a
    par = jnp.dot(att_par, xtb_ref[...], preferred_element_type=jnp.float32)      # (TM, D)
    # child contribution -> output rows of block b (transposed-LHS MXU contraction, no XLU)
    chi = jax.lax.dot_general(att_chi, xta_ref[...], (((0,), (0,)), ((), ())),
                              preferred_element_type=jnp.float32)                  # (TM, D)

    acc_ref[a] = acc_ref[a] + par
    acc_ref[b] = acc_ref[b] + chi

    @pl.when(jnp.logical_and(a == na - 1, b == nb - 1))
    def _():
        support = acc_ref[...].reshape(out_ref.shape)                  # (Np, D) f32
        sqrt_c = c ** 0.5
        # ---- expmap0 ----
        u_norm = jnp.maximum(
            jnp.sqrt(jnp.sum(support * support, axis=-1, keepdims=True)), MIN_NORM)
        scu = sqrt_c * u_norm
        gamma = (jnp.tanh(scu) / scu) * support
        # ---- proj (clip to ball of radius (1 - eps)/sqrt(c)) ----
        g_norm = jnp.maximum(
            jnp.sqrt(jnp.sum(gamma * gamma, axis=-1, keepdims=True)), MIN_NORM)
        maxnorm = (1.0 - PROJ_EPS) / sqrt_c
        factor = jnp.where(g_norm > maxnorm, maxnorm / g_norm, jnp.float32(1.0))
        out_ref[...] = (gamma * factor).astype(out_ref.dtype)


def bidirectional_agg(x, adj, w, b, *, c=1.0, tm=512, vmem_limit_bytes=None):
    """x: (N, D) f32, adj: (N, N) {0,1}, w: (4, D) f32, b: (2,) f32 = [b_par, b_chi]."""
    N, D = x.shape
    # TM must be a multiple of 128 (lane dim of the (TM, TM) / (1, TM) blocks).
    TM = _round_up(min(int(tm), _round_up(N, 128)), 128)
    Np = _round_up(N, TM)
    nA = Np // TM

    if vmem_limit_bytes is None:
        # Scoped-VMEM limit (not a reservation): above v5e's 16-MiB / v6e-v7x 32-MiB scoped
        # defaults, below v7x's 64-MiB physical VMEM.
        vmem_limit_bytes = 48 * 1024 * 1024

    x_p = jnp.pad(x.astype(jnp.float32), ((0, Np - N), (0, 0)))
    # adj is a binary mask -> bf16 is exact; halves the dominant HBM traffic.
    adj_p = jnp.pad(adj, ((0, Np - N), (0, Np - N))).astype(jnp.bfloat16)
    w = w.astype(jnp.float32)
    b = b.astype(jnp.float32)

    # ---- prologue: x_t + DenseAtt score vectors (once, O(N*D), tiled) ----
    xt_bf16, lpar, rpar, lchi, rchi = pl.pallas_call(
        functools.partial(_prologue_kernel, c=float(c)),
        grid=(nA,),
        out_shape=(
            jax.ShapeDtypeStruct((Np, D), jnp.bfloat16),
            jax.ShapeDtypeStruct((Np, 1), jnp.float32),
            jax.ShapeDtypeStruct((1, Np), jnp.float32),
            jax.ShapeDtypeStruct((1, Np), jnp.float32),
            jax.ShapeDtypeStruct((Np, 1), jnp.float32),
        ),
        in_specs=[
            pl.BlockSpec((TM, D), lambda i: (i, 0)),
            pl.BlockSpec((4, D), lambda i: (0, 0)),
            pl.BlockSpec(memory_space=pltpu.SMEM),
        ],
        out_specs=(
            pl.BlockSpec((TM, D), lambda i: (i, 0)),
            pl.BlockSpec((TM, 1), lambda i: (i, 0)),
            pl.BlockSpec((1, TM), lambda i: (0, i)),
            pl.BlockSpec((1, TM), lambda i: (0, i)),
            pl.BlockSpec((TM, 1), lambda i: (i, 0)),
        ),
        compiler_params=pltpu.CompilerParams(
            dimension_semantics=("parallel",),
            vmem_limit_bytes=vmem_limit_bytes),
    )(x_p, w, b)

    # ---- main aggregation: 2-D block grid, each adj block read once for both heads ----
    out = pl.pallas_call(
        functools.partial(_agg_kernel, c=float(c)),
        grid=(nA, nA),
        out_shape=jax.ShapeDtypeStruct((Np, D), jnp.float32),
        in_specs=[
            pl.BlockSpec((TM, 1), lambda i, j: (i, 0)),     # lpar (+b_par), row block a
            pl.BlockSpec((1, TM), lambda i, j: (0, j)),     # rpar, col block b
            pl.BlockSpec((1, TM), lambda i, j: (0, j)),     # lchi (+b_chi), col block b
            pl.BlockSpec((TM, 1), lambda i, j: (i, 0)),     # rchi, row block a
            pl.BlockSpec((TM, D), lambda i, j: (i, 0)),     # x_t rows a (child source)
            pl.BlockSpec((TM, D), lambda i, j: (j, 0)),     # x_t rows b (parent source)
            pl.BlockSpec((TM, TM), lambda i, j: (i, j)),    # adj block (single read)
        ],
        out_specs=pl.BlockSpec((Np, D), lambda i, j: (0, 0)),
        scratch_shapes=[pltpu.VMEM((nA, TM, D), jnp.float32)],
        compiler_params=pltpu.CompilerParams(
            dimension_semantics=("arbitrary", "arbitrary"),
            vmem_limit_bytes=vmem_limit_bytes),
    )(lpar, rpar, lchi, rchi, xt_bf16, xt_bf16, adj_p)

    return out[:N]


def _reference(x, adj, w, b, c=1.0):
    """Pure-JAX f32 reference mirroring the PyTorch forward."""
    sqrt_c = c ** 0.5
    x_norm = jnp.maximum(jnp.linalg.norm(x, axis=-1, keepdims=True), MIN_NORM)
    x_t = _artanh(sqrt_c * x_norm) / (sqrt_c * x_norm) * x

    def dense_att(feat, a, w_l, w_r, bias):
        s = feat @ w_l + bias
        t = feat @ w_r
        return jax.nn.sigmoid(s[:, None] + t[None, :]) * a

    att_par = dense_att(x_t, adj, w[0], w[1], b[0])
    att_chi = dense_att(x_t, adj.T, w[2], w[3], b[1])
    support = att_chi @ x_t + att_par @ x_t

    u_norm = jnp.maximum(jnp.linalg.norm(support, axis=-1, keepdims=True), MIN_NORM)
    gamma = jnp.tanh(sqrt_c * u_norm) * support / (sqrt_c * u_norm)
    g_norm = jnp.maximum(jnp.linalg.norm(gamma, axis=-1, keepdims=True), MIN_NORM)
    maxnorm = (1.0 - PROJ_EPS) / sqrt_c
    return jnp.where(g_norm > maxnorm, gamma / g_norm * maxnorm, gamma)


if __name__ == "__main__":
    N, D = 256, 64        # nodes, in_features (small; tm=128 -> 2x2 grid exercises accumulation)
    c = 1.0

    key = jax.random.PRNGKey(0)
    kx, kadj, kwp, kwc, kb = jax.random.split(key, 5)

    # points inside the Poincare ball
    x = (0.05 * jax.random.normal(kx, (N, D))).astype(jnp.float32)
    # dense binary adjacency
    adj = (jax.random.uniform(kadj, (N, N)) < 0.3).astype(jnp.float32)

    # DenseAtt params: Linear(2*D, 1) for each of parent/child heads
    w_par = (0.1 * jax.random.normal(kwp, (2 * D,))).astype(jnp.float32)
    w_chi = (0.1 * jax.random.normal(kwc, (2 * D,))).astype(jnp.float32)
    b = (0.1 * jax.random.normal(kb, (2,))).astype(jnp.float32)   # [b_par, b_chi]

    # pack weights: rows = [w_par_left, w_par_right, w_chi_left, w_chi_right]
    w = jnp.stack([w_par[:D], w_par[D:], w_chi[:D], w_chi[D:]], axis=0)

    out = bidirectional_agg(x, adj, w, b, c=c, tm=128)
    out = jax.block_until_ready(out)

    ref = _reference(x, adj, w, b, c=c)
    # Tolerance reflects intentional bf16 matmul operands / bf16 sigmoid (f32 accumulation).
    np.testing.assert_allclose(np.asarray(out), np.asarray(ref), rtol=2e-2, atol=5e-3)
    print("KERNEL_OK")
</pallas_src>

<mosaic_0001>
module attributes {stable_mosaic.version = 11 : i64} {
  func.func @_prologue_kernel(%arg0: i32, %arg1: memref<128x64xf32, #tpu.memory_space<vmem>>, %arg2: memref<4x64xf32, #tpu.memory_space<vmem>>, %arg3: memref<2xf32, #tpu.memory_space<smem>>, %arg4: memref<128x64xbf16, #tpu.memory_space<vmem>>, %arg5: memref<128x1xf32, #tpu.memory_space<vmem>>, %arg6: memref<1x128xf32, #tpu.memory_space<vmem>>, %arg7: memref<1x128xf32, #tpu.memory_space<vmem>>, %arg8: memref<128x1xf32, #tpu.memory_space<vmem>>) attributes {dimension_semantics = [#tpu.dimension_semantics<parallel>], iteration_bounds = array<i64: 2>, scalar_prefetch = 0 : i64, scratch_operands = 0 : i64, tpu.core_type = #tpu.core_type<tc>, window_params = [{transform_indices = @transform_0, window_bounds = array<i64: 128, 64>}, {pipeline_mode = #tpu.pipeline_mode<synchronous>, transform_indices = @transform_1, window_bounds = array<i64: 4, 64>}, {transform_indices = @transform_2, window_bounds = array<i64: 2>}, {transform_indices = @transform_3, window_bounds = array<i64: 128, 64>}, {transform_indices = @transform_4, window_bounds = array<i64: 128, 1>}, {transform_indices = @transform_5, window_bounds = array<i64: 1, 128>}, {transform_indices = @transform_6, window_bounds = array<i64: 1, 128>}, {transform_indices = @transform_7, window_bounds = array<i64: 128, 1>}]} {
    %c0 = arith.constant 0 : index
    %c0_0 = arith.constant 0 : index
    %0 = vector.load %arg1[%c0, %c0_0] : memref<128x64xf32, #tpu.memory_space<vmem>>, vector<128x64xf32>
    %c0_1 = arith.constant 0 : index
    %c0_2 = arith.constant 0 : index
    %1 = vector.load %arg2[%c0_1, %c0_2] : memref<4x64xf32, #tpu.memory_space<vmem>>, vector<4x64xf32>
    %2 = arith.mulf %0, %0 : vector<128x64xf32>
    %cst = arith.constant dense<0.000000e+00> : vector<128xf32>
    %3 = vector.multi_reduction <add>, %2, %cst [1] : vector<128x64xf32> to vector<128xf32>
    %4 = vector.shape_cast %3 : vector<128xf32> to vector<128x1xf32>
    %5 = math.sqrt %4 : vector<128x1xf32>
    %cst_3 = arith.constant 1.000000e-15 : f32
    %6 = vector.broadcast %cst_3 : f32 to vector<128x1xf32>
    %7 = arith.maximumf %5, %6 : vector<128x1xf32>
    %cst_4 = arith.constant 1.000000e+00 : f32
    %8 = vector.broadcast %cst_4 : f32 to vector<128x1xf32>
    %9 = arith.mulf %8, %7 : vector<128x1xf32>
    %cst_5 = arith.constant -0.99999988 : f32
    %cst_6 = arith.constant 0.99999988 : f32
    %10 = vector.broadcast %cst_5 : f32 to vector<128x1xf32>
    %11 = arith.maximumf %10, %9 : vector<128x1xf32>
    %12 = vector.broadcast %cst_6 : f32 to vector<128x1xf32>
    %13 = arith.minimumf %12, %11 : vector<128x1xf32>
    %cst_7 = arith.constant 1.000000e+00 : f32
    %14 = vector.broadcast %cst_7 : f32 to vector<128x1xf32>
    %15 = arith.addf %14, %13 : vector<128x1xf32>
    %cst_8 = arith.constant 1.000000e+00 : f32
    %16 = vector.broadcast %cst_8 : f32 to vector<128x1xf32>
    %17 = arith.subf %16, %13 : vector<128x1xf32>
    %18 = arith.divf %15, %17 : vector<128x1xf32>
    %19 = math.log %18 : vector<128x1xf32>
    %cst_9 = arith.constant 5.000000e-01 : f32
    %20 = vector.broadcast %cst_9 : f32 to vector<128x1xf32>
    %21 = arith.mulf %20, %19 : vector<128x1xf32>
    %cst_10 = arith.constant 1.000000e+00 : f32
    %22 = vector.broadcast %cst_10 : f32 to vector<128x1xf32>
    %23 = arith.mulf %22, %7 : vector<128x1xf32>
    %24 = arith.divf %21, %23 : vector<128x1xf32>
    %25 = vector.broadcast %24 : vector<128x1xf32> to vector<128x64xf32>
    %26 = arith.mulf %25, %0 : vector<128x64xf32>
    %27 = arith.truncf %26 : vector<128x64xf32> to vector<128x64xbf16>
    %c0_11 = arith.constant 0 : index
    %c0_12 = arith.constant 0 : index
    %28 = vector.load %arg4[%c0_11, %c0_12] : memref<128x64xbf16, #tpu.memory_space<vmem>>, vector<128x64xbf16>
    tpu.vector_store %arg4[%c0_11, %c0_12], %27 {strides = array<i32>} : memref<128x64xbf16, #tpu.memory_space<vmem>>, vector<128x64xbf16>,
    "tpu.trace_start"() <{level = 10 : i32, message = "nd,kd->nk"}> : () -> ()
    %cst_13 = arith.constant dense<0.000000e+00> : vector<128x4xf32>
    %29 = tpu.matmul %26, %1, %cst_13 {dimension_numbers = #tpu.dot_dimension_numbers<[1], [1], [0], [0], [0, 0, 1, 0], [], []>} : vector<128x64xf32>, vector<4x64xf32>, vector<128x4xf32> -> vector<128x4xf32>
    "tpu.trace_stop"() : () -> ()
    "tpu.trace_start"() <{level = 10 : i32, message = "kd,nd->kn"}> : () -> ()
    %cst_14 = arith.constant dense<0.000000e+00> : vector<4x128xf32>
    %30 = tpu.matmul %1, %26, %cst_14 {dimension_numbers = #tpu.dot_dimension_numbers<[1], [1], [0], [0], [0, 0, 1, 0], [], []>} : vector<4x64xf32>, vector<128x64xf32>, vector<4x128xf32> -> vector<4x128xf32>
    "tpu.trace_stop"() : () -> ()
    %31 = vector.extract_strided_slice %29 {offsets = [0, 0], sizes = [128, 1], strides = [1, 1]} : vector<128x4xf32> to vector<128x1xf32>
    %c0_15 = arith.constant 0 : index
    %32 = memref.load %arg3[%c0_15] : memref<2xf32, #tpu.memory_space<smem>>
    %33 = vector.broadcast %32 : f32 to vector<128x1xf32>
    %34 = arith.addf %31, %33 : vector<128x1xf32>
    %c0_16 = arith.constant 0 : index
    %c0_17 = arith.constant 0 : index
    %35 = vector.load %arg5[%c0_16, %c0_17] : memref<128x1xf32, #tpu.memory_space<vmem>>, vector<128x1xf32>
    tpu.vector_store %arg5[%c0_16, %c0_17], %34 {strides = array<i32>} : memref<128x1xf32, #tpu.memory_space<vmem>>, vector<128x1xf32>,
    %36 = vector.extract_strided_slice %29 {offsets = [0, 3], sizes = [128, 1], strides = [1, 1]} : vector<128x4xf32> to vector<128x1xf32>
    %c0_18 = arith.constant 0 : index
    %c0_19 = arith.constant 0 : index
    %37 = vector.load %arg8[%c0_18, %c0_19] : memref<128x1xf32, #tpu.memory_space<vmem>>, vector<128x1xf32>
    tpu.vector_store %arg8[%c0_18, %c0_19], %36 {strides = array<i32>} : memref<128x1xf32, #tpu.memory_space<vmem>>, vector<128x1xf32>,
    %38 = vector.extract_strided_slice %30 {offsets = [1, 0], sizes = [1, 128], strides = [1, 1]} : vector<4x128xf32> to vector<1x128xf32>
    %c0_20 = arith.constant 0 : index
    %c0_21 = arith.constant 0 : index
    %39 = vector.load %arg6[%c0_20, %c0_21] : memref<1x128xf32, #tpu.memory_space<vmem>>, vector<1x128xf32>
    tpu.vector_store %arg6[%c0_20, %c0_21], %38 {strides = array<i32>} : memref<1x128xf32, #tpu.memory_space<vmem>>, vector<1x128xf32>,
    %40 = vector.extract_strided_slice %30 {offsets = [2, 0], sizes = [1, 128], strides = [1, 1]} : vector<4x128xf32> to vector<1x128xf32>
    %c1 = arith.constant 1 : index
    %41 = memref.load %arg3[%c1] : memref<2xf32, #tpu.memory_space<smem>>
    %42 = vector.broadcast %41 : f32 to vector<1x128xf32>
    %43 = arith.addf %40, %42 : vector<1x128xf32>
    %c0_22 = arith.constant 0 : index
    %c0_23 = arith.constant 0 : index
    %44 = vector.load %arg7[%c0_22, %c0_23] : memref<1x128xf32, #tpu.memory_space<vmem>>, vector<1x128xf32>
    tpu.vector_store %arg7[%c0_22, %c0_23], %43 {strides = array<i32>} : memref<1x128xf32, #tpu.memory_space<vmem>>, vector<1x128xf32>,
    return
  }
  func.func @transform_0(%arg0: i32) -> (i32, i32) {
    %c0_i32 = arith.constant 0 : i32
    %c0_i32_0 = arith.constant 0 : i32
    return %arg0, %c0_i32 : i32, i32
  }
  func.func @transform_1(%arg0: i32) -> (i32, i32) {
    %c0_i32 = arith.constant 0 : i32
    %c0_i32_0 = arith.constant 0 : i32
    %c0_i32_1 = arith.constant 0 : i32
    return %c0_i32, %c0_i32_0 : i32, i32
  }
  func.func @transform_2(%arg0: i32) -> i32 {
    %c0_i32 = arith.constant 0 : i32
    %c0_i32_0 = arith.constant 0 : i32
    return %c0_i32 : i32
  }
  func.func @transform_3(%arg0: i32) -> (i32, i32) {
    %c0_i32 = arith.constant 0 : i32
    %c0_i32_0 = arith.constant 0 : i32
    return %arg0, %c0_i32 : i32, i32
  }
  func.func @transform_4(%arg0: i32) -> (i32, i32) {
    %c0_i32 = arith.constant 0 : i32
    %c0_i32_0 = arith.constant 0 : i32
    return %arg0, %c0_i32 : i32, i32
  }
  func.func @transform_5(%arg0: i32) -> (i32, i32) {
    %c0_i32 = arith.constant 0 : i32
    %c0_i32_0 = arith.constant 0 : i32
    return %c0_i32, %arg0 : i32, i32
  }
  func.func @transform_6(%arg0: i32) -> (i32, i32) {
    %c0_i32 = arith.constant 0 : i32
    %c0_i32_0 = arith.constant 0 : i32
    return %c0_i32, %arg0 : i32, i32
  }
  func.func @transform_7(%arg0: i32) -> (i32, i32) {
    %c0_i32 = arith.constant 0 : i32
    %c0_i32_0 = arith.constant 0 : i32
    return %arg0, %c0_i32 : i32, i32
  }
}

</mosaic_0001>

<llo_original>
// kernel: tpu_custom_call.1
$region0: #{tpu_custom_call.1}
  #allocation0 [shape = 'u32[]', space=smem, size = 0x4, offset = 0x4, fixed_abs, tag = 'smem constant byte address 0x4 - core index']
  #allocation1 [shape = 'u32[144,128]{1,0:T(1,128)}', space=vmem, size = 0x12000, scoped, tag = 'internal scratch']
  %s0 = inlined_call_operand.vmem [shape: f32[256,64], index: 0, kind: input, shape index: {}]
  %s1 = inlined_call_operand.vmem [shape: f32[4,64], index: 1, kind: input, shape index: {}]
  %s2 = inlined_call_operand.vmem [shape: f32[2], index: 2, kind: input, shape index: {}]
  %s3 = inlined_call_operand.vmem [shape: bf16[256,64], index: 3, kind: output, shape index: {0}]
  %s4 = inlined_call_operand.vmem [shape: f32[256,1], index: 4, kind: output, shape index: {1}]
  %s5 = inlined_call_operand.hbm [shape: f32[1,256], index: 5, kind: output, shape index: {2}]
  %s6 = inlined_call_operand.hbm [shape: f32[1,256], index: 6, kind: output, shape index: {3}]
  %s7 = inlined_call_operand.vmem [shape: f32[256,1], index: 7, kind: output, shape index: {4}]
  %8 = xla_tuple %s3, %s4, %s5, %s6, %s7
  %s9 = sld [smem:[#allocation0]]
  $region81: #{tpu_custom_call.1} parent=0
    _
  %s11 = ssub.s32 1, %s9
  %s12 = scalar_select 0, %s11, %s9
  $region1: #{tpu_custom_call.1} parent=0
    #allocation2 [shape = 'u8[512]{0}', space=smem, size = 0x200, scoped, tag = 'input window, operand 2, single buffered']
    #allocation3 [shape = 's32[2]{0}', space=sflag, size = 0x8, scoped, tag = 'scoped memory for tpu_custom_call.1']
    #allocation4 [shape = 's32[2]{0}', space=sflag, size = 0x8, scoped, tag = 'scoped memory for tpu_custom_call.1']
    #allocation5 [shape = 'u8[1024]{0}', space=vmem, size = 0x400, scoped, tag = 'output window, operand 2']
    #allocation6 [shape = 'u8[1024]{0}', space=vmem, size = 0x400, scoped, tag = 'output window, operand 3']
    #allocation7 [shape = 's32[2]{0}', space=sflag, size = 0x8, scoped, tag = 'scoped memory for tpu_custom_call.1']
    %13 = vsyncpa [#allocation4], 0
    %14 = vsyncpa [#allocation3], 0
    %s15 = scalar_lea.sflag [#allocation3], 1
    %16 = vsyncpa %s15, 0
    %17 = vsyncpa [#allocation7], 0
    %s18 = scalar_lea.sflag [#allocation7], 1
    %19 = vsyncpa %s18, 0
    loop: start=0, step=1, limit=4
    $region2: #{tpu_custom_call.1} parent=1 // loop_pre_header
      _
    $region3: #{tpu_custom_call.1} parent=1 // loop_header
      %s21 = sphi 0, %s25
      %p22 = scmp.ge.s32.totalorder %s21, 4
      %s31 = sphi 0, %s33
      %s34 = sphi 0, %s31
      %s35 = sphi 0, %s34
      %s51 = sphi 0, %s35
      %s55 = sphi 0, %s55
      %s57 = sphi 0, %s55
      %s58 = sphi 0, %s57
      %s72 = sphi 0, %s58
      %s76 = sphi 0, %s76
      %s78 = sphi 0, %s76
      %s79 = sphi 0, %s78
      %s93 = sphi 0, %s79
      %s99 = sphi 0, %s101
      %s102 = sphi 0, %s99
      %s103 = sphi 0, %s102
      %s119 = sphi 0, %s103
      %s125 = sphi 0, %s127
      %s128 = sphi 0, %s125
      %s129 = sphi 0, %s128
      %s145 = sphi 0, %s129
      %s151 = sphi 0, %s153
      %s154 = sphi 0, %s151
      %s155 = sphi 0, %s154
      %s171 = sphi 0, %s155
      %s177 = sphi 0, %s179
      %s180 = sphi 0, %s177
      %s181 = sphi 0, %s180
      %s197 = sphi 0, %s181
      %s203 = sphi 0, %s205
      %s206 = sphi 0, %s203
      %s207 = sphi 0, %s206
      %s223 = sphi 0, %s207
    $region4: #{tpu_custom_call.1} parent=1 // loop_header_branch
      %24 = sbr.rel (%p22) target = $region8
    $region5: #{tpu_custom_call.1} parent=1 // loop_body
      %s26 = ssub.s32 %s21, 1
      %s27 = ssub.s32 %s21, 2
      %s28 = sadd.s32 %s21, 1
      %s29 = ssub.s32 %s21, %s28
      %p30 = scmp.eq.s32.totalorder %s29, 0
      %s32 = sadd.s32 %s31, 1
      %s33 = scalar_select %p30, %s31, %s32
      %p36 = pneg %p30
      %p37 = scmp.eq.s32.totalorder %s21, 1
      %p38 = por %p36, %p37
      %p39 = scmp.ne.s32.totalorder %s31, %s34
      %p40 = scmp.eq.s32.totalorder %s21, 0
      %p41 = por %p39, %p40
      %p42 = scmp.ne.s32.totalorder %s31, %s34
      %p43 = scmp.eq.s32.totalorder %s26, 1
      %p44 = por %p42, %p43
      %p45 = scmp.ne.s32.totalorder %s34, %s35
      %p46 = scmp.eq.s32.totalorder %s26, 0
      %p47 = por %p45, %p46
      %p48 = scmp.ne.s32.totalorder %s34, %s35
      %p49 = scmp.eq.s32.totalorder %s27, 1
      %p50 = por %p48, %p49
      %p52 = scmp.ne.s32.totalorder %s35, %s51
      %p53 = scmp.eq.s32.totalorder %s27, 0
      %p54 = por %p52, %p53
      %s56 = sadd.s32 %s55, 1
      %p59 = scmp.eq.s32.totalorder %s21, 1
      %p60 = scmp.ne.s32.totalorder %s55, %s57
      %p61 = scmp.eq.s32.totalorder %s21, 0
      %p62 = por %p60, %p61
      %p63 = scmp.ne.s32.totalorder %s55, %s57
      %p64 = scmp.eq.s32.totalorder %s26, 1
      %p65 = por %p63, %p64
      %p66 = scmp.ne.s32.totalorder %s57, %s58
      %p67 = scmp.eq.s32.totalorder %s26, 0
      %p68 = por %p66, %p67
      %p69 = scmp.ne.s32.totalorder %s57, %s58
      %p70 = scmp.eq.s32.totalorder %s27, 1
      %p71 = por %p69, %p70
      %p73 = scmp.ne.s32.totalorder %s58, %s72
      %p74 = scmp.eq.s32.totalorder %s27, 0
      %p75 = por %p73, %p74
      %s77 = sadd.s32 %s76, 1
      %p80 = scmp.eq.s32.totalorder %s21, 1
      %p81 = scmp.ne.s32.totalorder %s76, %s78
      %p82 = scmp.eq.s32.totalorder %s21, 0
      %p83 = por %p81, %p82
      %p84 = scmp.ne.s32.totalorder %s76, %s78
      %p85 = scmp.eq.s32.totalorder %s26, 1
      %p86 = por %p84, %p85
      %p87 = scmp.ne.s32.totalorder %s78, %s79
      %p88 = scmp.eq.s32.totalorder %s26, 0
      %p89 = por %p87, %p88
      %p90 = scmp.ne.s32.totalorder %s78, %s79
      %p91 = scmp.eq.s32.totalorder %s27, 1
      %p92 = por %p90, %p91
      %p94 = scmp.ne.s32.totalorder %s79, %s93
      %p95 = scmp.eq.s32.totalorder %s27, 0
      %p96 = por %p94, %p95
      %s97 = ssub.s32 %s21, %s28
      %p98 = scmp.eq.s32.totalorder %s97, 0
      %s100 = sadd.s32 %s99, 1
      %s101 = scalar_select %p98, %s99, %s100
      %p104 = pneg %p98
      %p105 = scmp.eq.s32.totalorder %s21, 1
      %p106 = por %p104, %p105
      %p107 = scmp.ne.s32.totalorder %s99, %s102
      %p108 = scmp.eq.s32.totalorder %s21, 0
      %p109 = por %p107, %p108
      %p110 = scmp.ne.s32.totalorder %s99, %s102
      %p111 = scmp.eq.s32.totalorder %s26, 1
      %p112 = por %p110, %p111
      %p113 = scmp.ne.s32.totalorder %s102, %s103
      %p114 = scmp.eq.s32.totalorder %s26, 0
      %p115 = por %p113, %p114
      %p116 = scmp.ne.s32.totalorder %s102, %s103
      %p117 = scmp.eq.s32.totalorder %s27, 1
      %p118 = por %p116, %p117
      %p120 = scmp.ne.s32.totalorder %s103, %s119
      %p121 = scmp.eq.s32.totalorder %s27, 0
      %p122 = por %p120, %p121
      %s123 = ssub.s32 %s21, %s28
      %p124 = scmp.eq.s32.totalorder %s123, 0
      %s126 = sadd.s32 %s125, 1
      %s127 = scalar_select %p124, %s125, %s126
      %p130 = pneg %p124
      %p131 = scmp.eq.s32.totalorder %s21, 1
      %p132 = por %p130, %p131
      %p133 = scmp.ne.s32.totalorder %s125, %s128
      %p134 = scmp.eq.s32.totalorder %s21, 0
      %p135 = por %p133, %p134
      %p136 = scmp.ne.s32.totalorder %s125, %s128
      %p137 = scmp.eq.s32.totalorder %s26, 1
      %p138 = por %p136, %p137
      %p139 = scmp.ne.s32.totalorder %s128, %s129
      %p140 = scmp.eq.s32.totalorder %s26, 0
      %p141 = por %p139, %p140
      %p142 = scmp.ne.s32.totalorder %s128, %s129
      %p143 = scmp.eq.s32.totalorder %s27, 1
      %p144 = por %p142, %p143
      %p146 = scmp.ne.s32.totalorder %s129, %s145
      %p147 = scmp.eq.s32.totalorder %s27, 0
      %p148 = por %p146, %p147
      %s149 = ssub.s32 %s21, %s28
      %p150 = scmp.eq.s32.totalorder %s149, 0
      %s152 = sadd.s32 %s151, 1
      %s153 = scalar_select %p150, %s151, %s152
      %p156 = pneg %p150
      %p157 = scmp.eq.s32.totalorder %s21, 1
      %p158 = por %p156, %p157
      %p159 = scmp.ne.s32.totalorder %s151, %s154
      %p160 = scmp.eq.s32.totalorder %s21, 0
      %p161 = por %p159, %p160
      %p162 = scmp.ne.s32.totalorder %s151, %s154
      %p163 = scmp.eq.s32.totalorder %s26, 1
      %p164 = por %p162, %p163
      %p165 = scmp.ne.s32.totalorder %s154, %s155
      %p166 = scmp.eq.s32.totalorder %s26, 0
      %p167 = por %p165, %p166
      %p168 = scmp.ne.s32.totalorder %s154, %s155
      %p169 = scmp.eq.s32.totalorder %s27, 1
      %p170 = por %p168, %p169
      %p172 = scmp.ne.s32.totalorder %s155, %s171
      %p173 = scmp.eq.s32.totalorder %s27, 0
      %p174 = por %p172, %p173
      %s175 = ssub.s32 %s21, %s28
      %p176 = scmp.eq.s32.totalorder %s175, 0
      %s178 = sadd.s32 %s177, 1
      %s179 = scalar_select %p176, %s177, %s178
      %p182 = pneg %p176
      %p183 = scmp.eq.s32.totalorder %s21, 1
      %p184 = por %p182, %p183
      %p185 = scmp.ne.s32.totalorder %s177, %s180
      %p186 = scmp.eq.s32.totalorder %s21, 0
      %p187 = por %p185, %p186
      %p188 = scmp.ne.s32.totalorder %s177, %s180
      %p189 = scmp.eq.s32.totalorder %s26, 1
      %p190 = por %p188, %p189
      %p191 = scmp.ne.s32.totalorder %s180, %s181
      %p192 = scmp.eq.s32.totalorder %s26, 0
      %p193 = por %p191, %p192
      %p194 = scmp.ne.s32.totalorder %s180, %s181
      %p195 = scmp.eq.s32.totalorder %s27, 1
      %p196 = por %p194, %p195
      %p198 = scmp.ne.s32.totalorder %s181, %s197
      %p199 = scmp.eq.s32.totalorder %s27, 0
      %p200 = por %p198, %p199
      %s201 = ssub.s32 %s21, %s28
      %p202 = scmp.eq.s32.totalorder %s201, 0
      %s204 = sadd.s32 %s203, 1
      %s205 = scalar_select %p202, %s203, %s204
      %p208 = pneg %p202
      %p209 = scmp.eq.s32.totalorder %s21, 1
      %p210 = por %p208, %p209
      %p211 = scmp.ne.s32.totalorder %s203, %s206
      %p212 = scmp.eq.s32.totalorder %s21, 0
      %p213 = por %p211, %p212
      %p214 = scmp.ne.s32.totalorder %s203, %s206
      %p215 = scmp.eq.s32.totalorder %s26, 1
      %p216 = por %p214, %p215
      %p217 = scmp.ne.s32.totalorder %s206, %s207
      %p218 = scmp.eq.s32.totalorder %s26, 0
      %p219 = por %p217, %p218
      %p220 = scmp.ne.s32.totalorder %s206, %s207
      %p221 = scmp.eq.s32.totalorder %s27, 1
      %p222 = por %p220, %p221
      %p224 = scmp.ne.s32.totalorder %s207, %s223
      %p225 = scmp.eq.s32.totalorder %s27, 0
      %p226 = por %p224, %p225
      %p227 = scmp.le.s32.totalorder 1, %s21
      %p228 = scmp.lt.s32.totalorder %s21, 3
      %p229 = pnand %p227, %p228
      %p230 = pneg %p229
      // Predicated region
      $region9: #{tpu_custom_call.1} parent=5 // pred_check
        _
      $region10: #{tpu_custom_call.1} parent=5 // pred_check_branch
        %232 = sbr.rel (%p229) target = $region12
      $region11: #{tpu_custom_call.1} parent=5 // pred_region
        %s233 = ssub.s32 %s21, 1
        // Predicated region
        $region13: #{tpu_custom_call.1} parent=11 // pred_check
          %p234 = pneg %p68
        $region14: #{tpu_custom_call.1} parent=11 // pred_check_branch
          %236 = sbr.rel (%p234) target = $region16
        $region15: #{tpu_custom_call.1} parent=11 // pred_region
          _
        $region16: #{tpu_custom_call.1} parent=11 // pred_fallthru
          _
        // Predicated region
        $region17: #{tpu_custom_call.1} parent=11 // pred_check
          %p237 = pneg %p89
        $region18: #{tpu_custom_call.1} parent=11 // pred_check_branch
          %239 = sbr.rel (%p237) target = $region20
        $region19: #{tpu_custom_call.1} parent=11 // pred_region
          %s241 = ssub.s32 16, 16
          %242 = vsyncadd [#allocation4], %s241
          %s244 = sshll.u32 %s2, 4
          %s245 = int_to_ptr.vmem [resolvable:$true] %s244
          %247 = dma.vmem_to_smem %s245, 16, [#allocation2], [#allocation4]
        $region20: #{tpu_custom_call.1} parent=11 // pred_fallthru
          _
      $region12: #{tpu_custom_call.1} parent=5 // pred_fallthru
        _
      %p248 = scmp.lt.s32.totalorder %s21, 2
      // Predicated region
      $region21: #{tpu_custom_call.1} parent=5 // pred_check
        %p249 = pneg %p248
      $region22: #{tpu_custom_call.1} parent=5 // pred_check_branch
        %251 = sbr.rel (%p249) target = $region24
      $region23: #{tpu_custom_call.1} parent=5 // pred_region
        // Predicated region
        $region25: #{tpu_custom_call.1} parent=23 // pred_check
          %p252 = pneg %p41
        $region26: #{tpu_custom_call.1} parent=23 // pred_check_branch
          %254 = sbr.rel (%p252) target = $region28
        $region27: #{tpu_custom_call.1} parent=23 // pred_region
          %s255 = smul.u32 16, %s21
          %p256 = scmp.lt.s32.totalorder %s255, 31
          %s257 = scalar_select %p256, %s255, 31
          %s258 = smul.addr %s257, 8
          %s259 = scalar_lea.vmem %s0, %s258
          %s260 = smul.u32 16, %s21
        $region28: #{tpu_custom_call.1} parent=23 // pred_fallthru
          _
      $region24: #{tpu_custom_call.1} parent=5 // pred_fallthru
        _
      %p261 = scmp.le.s32.totalorder 1, %s21
      %p262 = scmp.lt.s32.totalorder %s21, 3
      %p263 = pnand %p261, %p262
      %p264 = pneg %p263
      // Predicated region
      $region29: #{tpu_custom_call.1} parent=5 // pred_check
        _
      $region30: #{tpu_custom_call.1} parent=5 // pred_check_branch
        %266 = sbr.rel (%p263) target = $region32
      $region31: #{tpu_custom_call.1} parent=5 // pred_region
        %s267 = ssub.s32 %s21, 1
        // Predicated region
        $region33: #{tpu_custom_call.1} parent=31 // pred_check
          %p268 = pneg %p89
        $region34: #{tpu_custom_call.1} parent=31 // pred_check_branch
          %270 = sbr.rel (%p268) target = $region36
        $region35: #{tpu_custom_call.1} parent=31 // pred_region
          %271 = dma.done [#allocation4], 16
        $region36: #{tpu_custom_call.1} parent=31 // pred_fallthru
          _
        %272 = sfence
        %s273 = smul.u32 16, %s26
        %p274 = scmp.lt.s32.totalorder %s273, 31
        %s275 = scalar_select %p274, %s273, 31
        %s276 = smul.addr %s275, 8
        %s277 = scalar_lea.vmem %s0, %s276
        %p278 = pneg %p47
        %p279 = pneg %p44
        %p280 = pneg %p68
        %p281 = pneg %p65
        %p282 = pneg %p89
        %p283 = pneg %p86
        %p284 = pneg %p115
        %p285 = pneg %p112
        %s286 = smul.u32 16, %s26
        %p287 = scmp.lt.s32.totalorder %s286, 31
        %s288 = scalar_select %p287, %s286, 31
        %s289 = smul.addr %s288, 4
        %s290 = scalar_lea.vmem %s3, %s289
        %p291 = pneg %p141
        %p292 = pneg %p138
        %s293 = smul.u32 16, %s26
        %p294 = scmp.lt.s32.totalorder %s293, 31
        %s295 = scalar_select %p294, %s293, 31
        %s296 = smul.addr %s295, 8
        %s297 = scalar_lea.vmem %s4, %s296
        %p298 = pneg %p167
        %p299 = pneg %p164
        %s300 = sand.u32 %s154, 1
        %s301 = scalar_lea.sflag [#allocation3], %s300
        %s302 = sand.u32 %s154, 1
        %s303 = scalar_lea.vmem [#allocation5], %s302
        %p304 = pneg %p193
        %p305 = pneg %p190
        %s306 = sand.u32 %s180, 1
        %s307 = scalar_lea.sflag [#allocation7], %s306
        %s308 = sand.u32 %s180, 1
        %s309 = scalar_lea.vmem [#allocation6], %s308
        %p310 = pneg %p219
        %p311 = pneg %p216
        %s312 = smul.u32 16, %s26
        %p313 = scmp.lt.s32.totalorder %s312, 31
        %s314 = scalar_select %p313, %s312, 31
        %s315 = smul.addr %s314, 8
        %s316 = scalar_lea.vmem %s7, %s315
        %s317 = smul.u32 16, %s26
        %p318 = scmp.lt.s32.totalorder %s317, 31
        %s319 = scalar_select %p318, %s317, 31
        %s320 = smul.addr %s319, 8
        %s321 = scalar_lea.vmem %s0, %s320
        %s322 = smul.u32 16, %s26
        %s323 = smul.u32 16, %s26
        %p324 = scmp.lt.s32.totalorder %s323, 31
        %s325 = scalar_select %p324, %s323, 31
        %s326 = smul.addr %s325, 4
        %s327 = scalar_lea.vmem %s3, %s326
        %s328 = smul.u32 16, %s26
        %s329 = smul.u32 16, %s26
        %p330 = scmp.lt.s32.totalorder %s329, 31
        %s331 = scalar_select %p330, %s329, 31
        %s332 = smul.addr %s331, 8
        %s333 = scalar_lea.vmem %s4, %s332
        %s334 = smul.u32 16, %s26
        %s335 = smul.u32 16, %s26
        %p336 = scmp.lt.s32.totalorder %s335, 31
        %s337 = scalar_select %p336, %s335, 31
        %s338 = smul.addr %s337, 8
        %s339 = scalar_lea.vmem %s7, %s338
        %s340 = smul.u32 16, %s26
        %v341 = vld [vmem:[%s321] sm:$0xff]
        %v342 = vld [vmem:[%s321 + $0x8] sm:$0xff]
        %v343 = vld [vmem:[%s321 + $0x10] sm:$0xff]
        %v344 = vld [vmem:[%s321 + $0x18] sm:$0xff]
        %v345 = vld [vmem:[%s321 + $0x20] sm:$0xff]
        %v346 = vld [vmem:[%s321 + $0x28] sm:$0xff]
        %v347 = vld [vmem:[%s321 + $0x30] sm:$0xff]
        %v348 = vld [vmem:[%s321 + $0x38] sm:$0xff]
        %v349 = vld [vmem:[%s321 + $0x40] sm:$0xff]
        %v350 = vld [vmem:[%s321 + $0x48] sm:$0xff]
        %v351 = vld [vmem:[%s321 + $0x50] sm:$0xff]
        %v352 = vld [vmem:[%s321 + $0x58] sm:$0xff]
        %v353 = vld [vmem:[%s321 + $0x60] sm:$0xff]
        %v354 = vld [vmem:[%s321 + $0x68] sm:$0xff]
        %v355 = vld [vmem:[%s321 + $0x70] sm:$0xff]
        %v356 = vld [vmem:[%s321 + $0x78] sm:$0xff]
        %v357 = vld [vmem:[%s1] sm:$0xf]
        %v358 = vmul.f32 %v341, %v341
        %v359 = vmul.f32 %v342, %v342
        %v360 = vmul.f32 %v343, %v343
        %v361 = vmul.f32 %v344, %v344
        %v362 = vmul.f32 %v345, %v345
        %v363 = vmul.f32 %v346, %v346
        %v364 = vmul.f32 %v347, %v347
        %v365 = vmul.f32 %v348, %v348
        %v366 = vmul.f32 %v349, %v349
        %v367 = vmul.f32 %v350, %v350
        %v368 = vmul.f32 %v351, %v351
        %v369 = vmul.f32 %v352, %v352
        %v370 = vmul.f32 %v353, %v353
        %v371 = vmul.f32 %v354, %v354
        %v372 = vmul.f32 %v355, %v355
        %v373 = vmul.f32 %v356, %v356
        %vm374 = vcmask 523264
        %v375 = vsel %vm374, %v358, 0.0
        %376 = vadd.xlane.f32.xlu0 %v375
        %v377 = vpop.xlane.xlu0 %376
        %v378 = vsel %vm374, %v359, 0.0
        %379 = vadd.xlane.f32.xlu0 %v378
        %v380 = vpop.xlane.xlu0 %379
        %v381 = vsel %vm374, %v360, 0.0
        %382 = vadd.xlane.f32.xlu0 %v381
        %v383 = vpop.xlane.xlu0 %382
        %v384 = vsel %vm374, %v361, 0.0
        %385 = vadd.xlane.f32.xlu0 %v384
        %v386 = vpop.xlane.xlu0 %385
        %v387 = vsel %vm374, %v362, 0.0
        %388 = vadd.xlane.f32.xlu0 %v387
        %v389 = vpop.xlane.xlu0 %388
        %v390 = vsel %vm374, %v363, 0.0
        %391 = vadd.xlane.f32.xlu0 %v390
        %v392 = vpop.xlane.xlu0 %391
        %v393 = vsel %vm374, %v364, 0.0
        %394 = vadd.xlane.f32.xlu0 %v393
        %v395 = vpop.xlane.xlu0 %394
        %v396 = vsel %vm374, %v365, 0.0
        %397 = vadd.xlane.f32.xlu0 %v396
        %v398 = vpop.xlane.xlu0 %397
        %v399 = vsel %vm374, %v366, 0.0
        %400 = vadd.xlane.f32.xlu0 %v399
        %v401 = vpop.xlane.xlu0 %400
        %v402 = vsel %vm374, %v367, 0.0
        %403 = vadd.xlane.f32.xlu0 %v402
        %v404 = vpop.xlane.xlu0 %403
        %v405 = vsel %vm374, %v368, 0.0
        %406 = vadd.xlane.f32.xlu0 %v405
        %v407 = vpop.xlane.xlu0 %406
        %v408 = vsel %vm374, %v369, 0.0
        %409 = vadd.xlane.f32.xlu0 %v408
        %v410 = vpop.xlane.xlu0 %409
        %v411 = vsel %vm374, %v370, 0.0
        %412 = vadd.xlane.f32.xlu0 %v411
        %v413 = vpop.xlane.xlu0 %412
        %v414 = vsel %vm374, %v371, 0.0
        %415 = vadd.xlane.f32.xlu0 %v414
        %v416 = vpop.xlane.xlu0 %415
        %v417 = vsel %vm374, %v372, 0.0
        %418 = vadd.xlane.f32.xlu0 %v417
        %v419 = vpop.xlane.xlu0 %418
        %v420 = vsel %vm374, %v373, 0.0
        %421 = vadd.xlane.f32.xlu0 %v420
        %v422 = vpop.xlane.xlu0 %421
        %v423 = vrsqrt.pop %v377
        %v424 = vmul.f32 %v377, %v423
        %vm425 = vcmp.eq.f32.partialorder %v377, inf
        %v426 = vsel %vm425, %v377, %v424
        %vm427 = vcmp.eq.f32.partialorder %v377, 0.0
        %v428 = vand.u32 %v377, 2147483648
        %v429 = vsel %vm427, %v428, %v426
        %v430 = vrsqrt.pop %v380
        %v431 = vmul.f32 %v380, %v430
        %vm432 = vcmp.eq.f32.partialorder %v380, inf
        %v433 = vsel %vm432, %v380, %v431
        %vm434 = vcmp.eq.f32.partialorder %v380, 0.0
        %v435 = vand.u32 %v380, 2147483648
        %v436 = vsel %vm434, %v435, %v433
        %v437 = vrsqrt.pop %v383
        %v438 = vmul.f32 %v383, %v437
        %vm439 = vcmp.eq.f32.partialorder %v383, inf
        %v440 = vsel %vm439, %v383, %v438
        %vm441 = vcmp.eq.f32.partialorder %v383, 0.0
        %v442 = vand.u32 %v383, 2147483648
        %v443 = vsel %vm441, %v442, %v440
        %v444 = vrsqrt.pop %v386
        %v445 = vmul.f32 %v386, %v444
        %vm446 = vcmp.eq.f32.partialorder %v386, inf
        %v447 = vsel %vm446, %v386, %v445
        %vm448 = vcmp.eq.f32.partialorder %v386, 0.0
        %v449 = vand.u32 %v386, 2147483648
        %v450 = vsel %vm448, %v449, %v447
        %v451 = vrsqrt.pop %v389
        %v452 = vmul.f32 %v389, %v451
        %vm453 = vcmp.eq.f32.partialorder %v389, inf
        %v454 = vsel %vm453, %v389, %v452
        %vm455 = vcmp.eq.f32.partialorder %v389, 0.0
        %v456 = vand.u32 %v389, 2147483648
        %v457 = vsel %vm455, %v456, %v454
        %v458 = vrsqrt.pop %v392
        %v459 = vmul.f32 %v392, %v458
        %vm460 = vcmp.eq.f32.partialorder %v392, inf
        %v461 = vsel %vm460, %v392, %v459
        %vm462 = vcmp.eq.f32.partialorder %v392, 0.0
        %v463 = vand.u32 %v392, 2147483648
        %v464 = vsel %vm462, %v463, %v461
        %v465 = vrsqrt.pop %v395
        %v466 = vmul.f32 %v395, %v465
        %vm467 = vcmp.eq.f32.partialorder %v395, inf
        %v468 = vsel %vm467, %v395, %v466
        %vm469 = vcmp.eq.f32.partialorder %v395, 0.0
        %v470 = vand.u32 %v395, 2147483648
        %v471 = vsel %vm469, %v470, %v468
        %v472 = vrsqrt.pop %v398
        %v473 = vmul.f32 %v398, %v472
        %vm474 = vcmp.eq.f32.partialorder %v398, inf
        %v475 = vsel %vm474, %v398, %v473
        %vm476 = vcmp.eq.f32.partialorder %v398, 0.0
        %v477 = vand.u32 %v398, 2147483648
        %v478 = vsel %vm476, %v477, %v475
        %v479 = vrsqrt.pop %v401
        %v480 = vmul.f32 %v401, %v479
        %vm481 = vcmp.eq.f32.partialorder %v401, inf
        %v482 = vsel %vm481, %v401, %v480
        %vm483 = vcmp.eq.f32.partialorder %v401, 0.0
        %v484 = vand.u32 %v401, 2147483648
        %v485 = vsel %vm483, %v484, %v482
        %v486 = vrsqrt.pop %v404
        %v487 = vmul.f32 %v404, %v486
        %vm488 = vcmp.eq.f32.partialorder %v404, inf
        %v489 = vsel %vm488, %v404, %v487
        %vm490 = vcmp.eq.f32.partialorder %v404, 0.0
        %v491 = vand.u32 %v404, 2147483648
        %v492 = vsel %vm490, %v491, %v489
        %v493 = vrsqrt.pop %v407
        %v494 = vmul.f32 %v407, %v493
        %vm495 = vcmp.eq.f32.partialorder %v407, inf
        %v496 = vsel %vm495, %v407, %v494
        %vm497 = vcmp.eq.f32.partialorder %v407, 0.0
        %v498 = vand.u32 %v407, 2147483648
        %v499 = vsel %vm497, %v498, %v496
        %v500 = vrsqrt.pop %v410
        %v501 = vmul.f32 %v410, %v500
        %vm502 = vcmp.eq.f32.partialorder %v410, inf
        %v503 = vsel %vm502, %v410, %v501
        %vm504 = vcmp.eq.f32.partialorder %v410, 0.0
        %v505 = vand.u32 %v410, 2147483648
        %v506 = vsel %vm504, %v505, %v503
        %v507 = vrsqrt.pop %v413
        %v508 = vmul.f32 %v413, %v507
        %vm509 = vcmp.eq.f32.partialorder %v413, inf
        %v510 = vsel %vm509, %v413, %v508
        %vm511 = vcmp.eq.f32.partialorder %v413, 0.0
        %v512 = vand.u32 %v413, 2147483648
        %v513 = vsel %vm511, %v512, %v510
        %v514 = vrsqrt.pop %v416
        %v515 = vmul.f32 %v416, %v514
        %vm516 = vcmp.eq.f32.partialorder %v416, inf
        %v517 = vsel %vm516, %v416, %v515
        %vm518 = vcmp.eq.f32.partialorder %v416, 0.0
        %v519 = vand.u32 %v416, 2147483648
        %v520 = vsel %vm518, %v519, %v517
        %v521 = vrsqrt.pop %v419
        %v522 = vmul.f32 %v419, %v521
        %vm523 = vcmp.eq.f32.partialorder %v419, inf
        %v524 = vsel %vm523, %v419, %v522
        %vm525 = vcmp.eq.f32.partialorder %v419, 0.0
        %v526 = vand.u32 %v419, 2147483648
        %v527 = vsel %vm525, %v526, %v524
        %v528 = vrsqrt.pop %v422
        %v529 = vmul.f32 %v422, %v528
        %vm530 = vcmp.eq.f32.partialorder %v422, inf
        %v531 = vsel %vm530, %v422, %v529
        %vm532 = vcmp.eq.f32.partialorder %v422, 0.0
        %v533 = vand.u32 %v422, 2147483648
        %v534 = vsel %vm532, %v533, %v531
        %v535 = vmax.f32 %v429, 1e-15
        %v536 = vmax.f32 %v436, 1e-15
        %v537 = vmax.f32 %v443, 1e-15
        %v538 = vmax.f32 %v450, 1e-15
        %v539 = vmax.f32 %v457, 1e-15
        %v540 = vmax.f32 %v464, 1e-15
        %v541 = vmax.f32 %v471, 1e-15
        %v542 = vmax.f32 %v478, 1e-15
        %v543 = vmax.f32 %v485, 1e-15
        %v544 = vmax.f32 %v492, 1e-15
        %v545 = vmax.f32 %v499, 1e-15
        %v546 = vmax.f32 %v506, 1e-15
        %v547 = vmax.f32 %v513, 1e-15
        %v548 = vmax.f32 %v520, 1e-15
        %v549 = vmax.f32 %v527, 1e-15
        %v550 = vmax.f32 %v534, 1e-15
        %v551 = vmax.f32 %v535, -0.9999999
        %v552 = vmax.f32 %v536, -0.9999999
        %v553 = vmax.f32 %v537, -0.9999999
        %v554 = vmax.f32 %v538, -0.9999999
        %v555 = vmax.f32 %v539, -0.9999999
        %v556 = vmax.f32 %v540, -0.9999999
        %v557 = vmax.f32 %v541, -0.9999999
        %v558 = vmax.f32 %v542, -0.9999999
        %v559 = vmax.f32 %v543, -0.9999999
        %v560 = vmax.f32 %v544, -0.9999999
        %v561 = vmax.f32 %v545, -0.9999999
        %v562 = vmax.f32 %v546, -0.9999999
        %v563 = vmax.f32 %v547, -0.9999999
        %v564 = vmax.f32 %v548, -0.9999999
        %v565 = vmax.f32 %v549, -0.9999999
        %v566 = vmax.f32 %v550, -0.9999999
        %v567 = vmin.f32 %v551, 0.9999999
        %v568 = vmin.f32 %v552, 0.9999999
        %v569 = vmin.f32 %v553, 0.9999999
        %v570 = vmin.f32 %v554, 0.9999999
        %v571 = vmin.f32 %v555, 0.9999999
        %v572 = vmin.f32 %v556, 0.9999999
        %v573 = vmin.f32 %v557, 0.9999999
        %v574 = vmin.f32 %v558, 0.9999999
        %v575 = vmin.f32 %v559, 0.9999999
        %v576 = vmin.f32 %v560, 0.9999999
        %v577 = vmin.f32 %v561, 0.9999999
        %v578 = vmin.f32 %v562, 0.9999999
        %v579 = vmin.f32 %v563, 0.9999999
        %v580 = vmin.f32 %v564, 0.9999999
        %v581 = vmin.f32 %v565, 0.9999999
        %v582 = vmin.f32 %v566, 0.9999999
        %v583 = vadd.f32 %v567, 1.0
        %v584 = vadd.f32 %v568, 1.0
        %v585 = vadd.f32 %v569, 1.0
        %v586 = vadd.f32 %v570, 1.0
        %v587 = vadd.f32 %v571, 1.0
        %v588 = vadd.f32 %v572, 1.0
        %v589 = vadd.f32 %v573, 1.0
        %v590 = vadd.f32 %v574, 1.0
        %v591 = vadd.f32 %v575, 1.0
        %v592 = vadd.f32 %v576, 1.0
        %v593 = vadd.f32 %v577, 1.0
        %v594 = vadd.f32 %v578, 1.0
        %v595 = vadd.f32 %v579, 1.0
        %v596 = vadd.f32 %v580, 1.0
        %v597 = vadd.f32 %v581, 1.0
        %v598 = vadd.f32 %v582, 1.0
        %v599 = vsub.f32 1.0, %v567
        %v600 = vsub.f32 1.0, %v568
        %v601 = vsub.f32 1.0, %v569
        %v602 = vsub.f32 1.0, %v570
        %v603 = vsub.f32 1.0, %v571
        %v604 = vsub.f32 1.0, %v572
        %v605 = vsub.f32 1.0, %v573
        %v606 = vsub.f32 1.0, %v574
        %v607 = vsub.f32 1.0, %v575
        %v608 = vsub.f32 1.0, %v576
        %v609 = vsub.f32 1.0, %v577
        %v610 = vsub.f32 1.0, %v578
        %v611 = vsub.f32 1.0, %v579
        %v612 = vsub.f32 1.0, %v580
        %v613 = vsub.f32 1.0, %v581
        %v614 = vsub.f32 1.0, %v582
        %v615 = vrcp.pop %v599
        %v616 = vmul.f32 %v583, %v615
        %v617 = vrcp.pop %v600
        %v618 = vmul.f32 %v584, %v617
        %v619 = vrcp.pop %v601
        %v620 = vmul.f32 %v585, %v619
        %v621 = vrcp.pop %v602
        %v622 = vmul.f32 %v586, %v621
        %v623 = vrcp.pop %v603
        %v624 = vmul.f32 %v587, %v623
        %v625 = vrcp.pop %v604
        %v626 = vmul.f32 %v588, %v625
        %v627 = vrcp.pop %v605
        %v628 = vmul.f32 %v589, %v627
        %v629 = vrcp.pop %v606
        %v630 = vmul.f32 %v590, %v629
        %v631 = vrcp.pop %v607
        %v632 = vmul.f32 %v591, %v631
        %v633 = vrcp.pop %v608
        %v634 = vmul.f32 %v592, %v633
        %v635 = vrcp.pop %v609
        %v636 = vmul.f32 %v593, %v635
        %v637 = vrcp.pop %v610
        %v638 = vmul.f32 %v594, %v637
        %v639 = vrcp.pop %v611
        %v640 = vmul.f32 %v595, %v639
        %v641 = vrcp.pop %v612
        %v642 = vmul.f32 %v596, %v641
        %v643 = vrcp.pop %v613
        %v644 = vmul.f32 %v597, %v643
        %v645 = vrcp.pop %v614
        %v646 = vmul.f32 %v598, %v645
        %v647 = vlog2.pop %v616
        %v648 = vmul.f32 %v647, 0.6931472
        %v649 = vlog2.pop %v618
        %v650 = vmul.f32 %v649, 0.6931472
        %v651 = vlog2.pop %v620
        %v652 = vmul.f32 %v651, 0.6931472
        %v653 = vlog2.pop %v622
        %v654 = vmul.f32 %v653, 0.6931472
        %v655 = vlog2.pop %v624
        %v656 = vmul.f32 %v655, 0.6931472
        %v657 = vlog2.pop %v626
        %v658 = vmul.f32 %v657, 0.6931472
        %v659 = vlog2.pop %v628
        %v660 = vmul.f32 %v659, 0.6931472
        %v661 = vlog2.pop %v630
        %v662 = vmul.f32 %v661, 0.6931472
        %v663 = vlog2.pop %v632
        %v664 = vmul.f32 %v663, 0.6931472
        %v665 = vlog2.pop %v634
        %v666 = vmul.f32 %v665, 0.6931472
        %v667 = vlog2.pop %v636
        %v668 = vmul.f32 %v667, 0.6931472
        %v669 = vlog2.pop %v638
        %v670 = vmul.f32 %v669, 0.6931472
        %v671 = vlog2.pop %v640
        %v672 = vmul.f32 %v671, 0.6931472
        %v673 = vlog2.pop %v642
        %v674 = vmul.f32 %v673, 0.6931472
        %v675 = vlog2.pop %v644
        %v676 = vmul.f32 %v675, 0.6931472
        %v677 = vlog2.pop %v646
        %v678 = vmul.f32 %v677, 0.6931472
        %v679 = vmul.f32 %v648, 0.5
        %v680 = vmul.f32 %v650, 0.5
        %v681 = vmul.f32 %v652, 0.5
        %v682 = vmul.f32 %v654, 0.5
        %v683 = vmul.f32 %v656, 0.5
        %v684 = vmul.f32 %v658, 0.5
        %v685 = vmul.f32 %v660, 0.5
        %v686 = vmul.f32 %v662, 0.5
        %v687 = vmul.f32 %v664, 0.5
        %v688 = vmul.f32 %v666, 0.5
        %v689 = vmul.f32 %v668, 0.5
        %v690 = vmul.f32 %v670, 0.5
        %v691 = vmul.f32 %v672, 0.5
        %v692 = vmul.f32 %v674, 0.5
        %v693 = vmul.f32 %v676, 0.5
        %v694 = vmul.f32 %v678, 0.5
        %v695 = vrcp.pop %v535
        %v696 = vmul.f32 %v679, %v695
        %v697 = vrcp.pop %v536
        %v698 = vmul.f32 %v680, %v697
        %v699 = vrcp.pop %v537
        %v700 = vmul.f32 %v681, %v699
        %v701 = vrcp.pop %v538
        %v702 = vmul.f32 %v682, %v701
        %v703 = vrcp.pop %v539
        %v704 = vmul.f32 %v683, %v703
        %v705 = vrcp.pop %v540
        %v706 = vmul.f32 %v684, %v705
        %v707 = vrcp.pop %v541
        %v708 = vmul.f32 %v685, %v707
        %v709 = vrcp.pop %v542
        %v710 = vmul.f32 %v686, %v709
        %v711 = vrcp.pop %v543
        %v712 = vmul.f32 %v687, %v711
        %v713 = vrcp.pop %v544
        %v714 = vmul.f32 %v688, %v713
        %v715 = vrcp.pop %v545
        %v716 = vmul.f32 %v689, %v715
        %v717 = vrcp.pop %v546
        %v718 = vmul.f32 %v690, %v717
        %v719 = vrcp.pop %v547
        %v720 = vmul.f32 %v691, %v719
        %v721 = vrcp.pop %v548
        %v722 = vmul.f32 %v692, %v721
        %v723 = vrcp.pop %v549
        %v724 = vmul.f32 %v693, %v723
        %v725 = vrcp.pop %v550
        %v726 = vmul.f32 %v694, %v725
        %v727 = vmul.f32 %v696, %v341
        %v728 = vmul.f32 %v698, %v342
        %v729 = vmul.f32 %v700, %v343
        %v730 = vmul.f32 %v702, %v344
        %v731 = vmul.f32 %v704, %v345
        %v732 = vmul.f32 %v706, %v346
        %v733 = vmul.f32 %v708, %v347
        %v734 = vmul.f32 %v710, %v348
        %v735 = vmul.f32 %v712, %v349
        %v736 = vmul.f32 %v714, %v350
        %v737 = vmul.f32 %v716, %v351
        %v738 = vmul.f32 %v718, %v352
        %v739 = vmul.f32 %v720, %v353
        %v740 = vmul.f32 %v722, %v354
        %v741 = vmul.f32 %v724, %v355
        %v742 = vmul.f32 %v726, %v356
        %v743 = vpack.c.bf16 %v728, %v727
        %v744 = vpack.c.bf16 %v730, %v729
        %v745 = vpack.c.bf16 %v732, %v731
        %v746 = vpack.c.bf16 %v734, %v733
        %v747 = vpack.c.bf16 %v736, %v735
        %v748 = vpack.c.bf16 %v738, %v737
        %v749 = vpack.c.bf16 %v740, %v739
        %v750 = vpack.c.bf16 %v742, %v741
        %v759 = vunpack.c.l.b16 %v743
        %v760 = vunpack.c.h.b16 %v743
        %v761 = vunpack.c.l.b16 %v744
        %v762 = vunpack.c.h.b16 %v744
        %v763 = vunpack.c.l.b16 %v745
        %v764 = vunpack.c.h.b16 %v745
        %v765 = vunpack.c.l.b16 %v746
        %v766 = vunpack.c.h.b16 %v746
        %v767 = vunpack.c.l.b16 %v747
        %v768 = vunpack.c.h.b16 %v747
        %v769 = vunpack.c.l.b16 %v748
        %v770 = vunpack.c.h.b16 %v748
        %v771 = vunpack.c.l.b16 %v749
        %v772 = vunpack.c.h.b16 %v749
        %v773 = vunpack.c.l.b16 %v750
        %v774 = vunpack.c.h.b16 %v750
        %v775 = vpack.c.b16 %v759, %v759
        %v776 = vpack.c.b16 %v760, %v760
        %v777 = vpack.c.b16 %v761, %v761
        %v778 = vpack.c.b16 %v762, %v762
        %v779 = vpack.c.b16 %v763, %v763
        %v780 = vpack.c.b16 %v764, %v764
        %v781 = vpack.c.b16 %v765, %v765
        %v782 = vpack.c.b16 %v766, %v766
        %v783 = vpack.c.b16 %v767, %v767
        %v784 = vpack.c.b16 %v768, %v768
        %v785 = vpack.c.b16 %v769, %v769
        %v786 = vpack.c.b16 %v770, %v770
        %v787 = vpack.c.b16 %v771, %v771
        %v788 = vpack.c.b16 %v772, %v772
        %v789 = vpack.c.b16 %v773, %v773
        %v790 = vpack.c.b16 %v774, %v774
        %vm807 = vcmask 519168
        %808 = vst.msk [vmem:[%s327] sm:$0xf] %vm807, %v775
        %809 = vst.msk [vmem:[%s327 + $0x4] sm:$0xf] %vm807, %v776
        %810 = vst.msk [vmem:[%s327 + $0x8] sm:$0xf] %vm807, %v777
        %811 = vst.msk [vmem:[%s327 + $0xc] sm:$0xf] %vm807, %v778
        %812 = vst.msk [vmem:[%s327 + $0x10] sm:$0xf] %vm807, %v779
        %813 = vst.msk [vmem:[%s327 + $0x14] sm:$0xf] %vm807, %v780
        %814 = vst.msk [vmem:[%s327 + $0x18] sm:$0xf] %vm807, %v781
        %815 = vst.msk [vmem:[%s327 + $0x1c] sm:$0xf] %vm807, %v782
        %816 = vst.msk [vmem:[%s327 + $0x20] sm:$0xf] %vm807, %v783
        %817 = vst.msk [vmem:[%s327 + $0x24] sm:$0xf] %vm807, %v784
        %818 = vst.msk [vmem:[%s327 + $0x28] sm:$0xf] %vm807, %v785
        %819 = vst.msk [vmem:[%s327 + $0x2c] sm:$0xf] %vm807, %v786
        %820 = vst.msk [vmem:[%s327 + $0x30] sm:$0xf] %vm807, %v787
        %821 = vst.msk [vmem:[%s327 + $0x34] sm:$0xf] %vm807, %v788
        %822 = vst.msk [vmem:[%s327 + $0x38] sm:$0xf] %vm807, %v789
        %823 = vst.msk [vmem:[%s327 + $0x3c] sm:$0xf] %vm807, %v790
        %v825 = vsel %vm374, %v727, 0
        %v828 = vsel %vm374, %v728, 0
        %v831 = vsel %vm374, %v729, 0
        %v834 = vsel %vm374, %v730, 0
        %v837 = vsel %vm374, %v731, 0
        %v840 = vsel %vm374, %v732, 0
        %v843 = vsel %vm374, %v733, 0
        %v846 = vsel %vm374, %v734, 0
        %v849 = vsel %vm374, %v735, 0
        %v852 = vsel %vm374, %v736, 0
        %v855 = vsel %vm374, %v737, 0
        %v858 = vsel %vm374, %v738, 0
        %v861 = vsel %vm374, %v739, 0
        %v864 = vsel %vm374, %v740, 0
        %v867 = vsel %vm374, %v741, 0
        %v870 = vsel %vm374, %v742, 0
        %v873 = vsel %vm374, %v357, 0
        %875 = vmatprep.subr.mxu0 0.0
        %876 = vmatpush1.xpose.msra.mxu0 %v873
        %877 = vmatprep.subr.mxu0 0.0
        %878 = vmatpush1.xpose.msra.mxu0 0.0
        %879 = vmatprep.subr.mxu0 0.0
        %880 = vmatpush1.xpose.msra.mxu0 0.0
        %881 = vmatprep.subr.mxu0 0.0
        %882 = vmatpush1.xpose.msra.mxu0 0.0
        %883 = vmatprep.subr.mxu0 0.0
        %884 = vmatpush1.xpose.msra.mxu0 0.0
        %885 = vmatprep.subr.mxu0 0.0
        %886 = vmatpush1.xpose.msra.mxu0 0.0
        %887 = vmatprep.subr.mxu0 0.0
        %888 = vmatpush1.xpose.msra.mxu0 0.0
        %889 = vmatprep.subr.mxu0 0.0
        %890 = vmatpush1.xpose.msra.mxu0 0.0
        %891 = vmatprep.subr.mxu0 0.0
        %892 = vmatpush1.xpose.msra.mxu0 0.0
        %893 = vmatprep.subr.mxu0 0.0
        %894 = vmatpush1.xpose.msra.mxu0 0.0
        %895 = vmatprep.subr.mxu0 0.0
        %896 = vmatpush1.xpose.msra.mxu0 0.0
        %897 = vmatprep.subr.mxu0 0.0
        %898 = vmatpush1.xpose.msra.mxu0 0.0
        %899 = vmatprep.subr.mxu0 0.0
        %900 = vmatpush1.xpose.msra.mxu0 0.0
        %901 = vmatprep.subr.mxu0 0.0
        %902 = vmatpush1.xpose.msra.mxu0 0.0
        %903 = vmatprep.subr.mxu0 0.0
        %904 = vmatpush1.xpose.msra.mxu0 0.0
        %905 = vmatprep.subr.mxu0 0.0
        %906 = vmatpush1.xpose.msra.mxu0 0.0
        %907 = vmatprep.subr.mxu0 0.0
        %908 = vmatpush1.xpose.msra.mxu0 0.0
        %909 = vmatprep.subr.mxu0 0.0
        %910 = vmatpush1.xpose.msra.mxu0 0.0
        %911 = vmatprep.subr.mxu0 0.0
        %912 = vmatpush1.xpose.msra.mxu0 0.0
        %913 = vmatprep.subr.mxu0 0.0
        %914 = vmatpush1.xpose.msra.mxu0 0.0
        %915 = vmatprep.subr.mxu0 0.0
        %916 = vmatpush1.xpose.msra.mxu0 0.0
        %917 = vmatprep.subr.mxu0 0.0
        %918 = vmatpush1.xpose.msra.mxu0 0.0
        %919 = vmatprep.subr.mxu0 0.0
        %920 = vmatpush1.xpose.msra.mxu0 0.0
        %921 = vmatprep.subr.mxu0 0.0
        %922 = vmatpush1.xpose.msra.mxu0 0.0
        %923 = vmatprep.subr.mxu0 0.0
        %924 = vmatpush1.xpose.msra.mxu0 0.0
        %925 = vmatprep.subr.mxu0 0.0
        %926 = vmatpush1.xpose.msra.mxu0 0.0
        %927 = vmatprep.subr.mxu0 0.0
        %928 = vmatpush1.xpose.msra.mxu0 0.0
        %929 = vmatprep.subr.mxu0 0.0
        %930 = vmatpush1.xpose.msra.mxu0 0.0
        %931 = vmatprep.subr.mxu0 0.0
        %932 = vmatpush1.xpose.msra.mxu0 0.0
        %933 = vmatprep.subr.mxu0 0.0
        %934 = vmatpush1.xpose.msra.mxu0 0.0
        %935 = vmatprep.subr.mxu0 0.0
        %936 = vmatpush1.xpose.msra.mxu0 0.0
        %937 = vmatprep.subr.mxu0 0.0
        %938 = vmatpush1.xpose.msra.mxu0 0.0
        %939 = vmatprep.mubr.f32.mxu0 0.0
        %940 = vmatmul.mubr.f32.gmra.mrb[0].mxu0 %v825
        %v941 = vpop.f32.mrb[0].mxu0
        %v942 = vadd.f32 0.0, %v941
        %v943 = vpop.f32.mrb[0].mxu0
        %944 = vmatprep.mubr.f32.mxu0 0.0
        %945 = vmatmul.mubr.f32.gmra.mrb[0].mxu0 %v828
        %v946 = vpop.f32.mrb[0].mxu0
        %v947 = vadd.f32 0.0, %v946
        %v948 = vpop.f32.mrb[0].mxu0
        %949 = vmatprep.mubr.f32.mxu0 0.0
        %950 = vmatmul.mubr.f32.gmra.mrb[0].mxu0 %v831
        %v951 = vpop.f32.mrb[0].mxu0
        %v952 = vadd.f32 0.0, %v951
        %v953 = vpop.f32.mrb[0].mxu0
        %954 = vmatprep.mubr.f32.mxu0 0.0
        %955 = vmatmul.mubr.f32.gmra.mrb[0].mxu0 %v834
        %v956 = vpop.f32.mrb[0].mxu0
        %v957 = vadd.f32 0.0, %v956
        %v958 = vpop.f32.mrb[0].mxu0
        %959 = vmatprep.mubr.f32.mxu0 0.0
        %960 = vmatmul.mubr.f32.gmra.mrb[0].mxu0 %v837
        %v961 = vpop.f32.mrb[0].mxu0
        %v962 = vadd.f32 0.0, %v961
        %v963 = vpop.f32.mrb[0].mxu0
        %964 = vmatprep.mubr.f32.mxu0 0.0
        %965 = vmatmul.mubr.f32.gmra.mrb[0].mxu0 %v840
        %v966 = vpop.f32.mrb[0].mxu0
        %v967 = vadd.f32 0.0, %v966
        %v968 = vpop.f32.mrb[0].mxu0
        %969 = vmatprep.mubr.f32.mxu0 0.0
        %970 = vmatmul.mubr.f32.gmra.mrb[0].mxu0 %v843
        %v971 = vpop.f32.mrb[0].mxu0
        %v972 = vadd.f32 0.0, %v971
        %v973 = vpop.f32.mrb[0].mxu0
        %974 = vmatprep.mubr.f32.mxu0 0.0
        %975 = vmatmul.mubr.f32.gmra.mrb[0].mxu0 %v846
        %v976 = vpop.f32.mrb[0].mxu0
        %v977 = vadd.f32 0.0, %v976
        %v978 = vpop.f32.mrb[0].mxu0
        %979 = vmatprep.mubr.f32.mxu0 0.0
        %980 = vmatmul.mubr.f32.gmra.mrb[0].mxu0 %v849
        %v981 = vpop.f32.mrb[0].mxu0
        %v982 = vadd.f32 0.0, %v981
        %v983 = vpop.f32.mrb[0].mxu0
        %984 = vmatprep.mubr.f32.mxu0 0.0
        %985 = vmatmul.mubr.f32.gmra.mrb[0].mxu0 %v852
        %v986 = vpop.f32.mrb[0].mxu0
        %v987 = vadd.f32 0.0, %v986
        %v988 = vpop.f32.mrb[0].mxu0
        %989 = vmatprep.mubr.f32.mxu0 0.0
        %990 = vmatmul.mubr.f32.gmra.mrb[0].mxu0 %v855
        %v991 = vpop.f32.mrb[0].mxu0
        %v992 = vadd.f32 0.0, %v991
        %v993 = vpop.f32.mrb[0].mxu0
        %994 = vmatprep.mubr.f32.mxu0 0.0
        %995 = vmatmul.mubr.f32.gmra.mrb[0].mxu0 %v858
        %v996 = vpop.f32.mrb[0].mxu0
        %v997 = vadd.f32 0.0, %v996
        %v998 = vpop.f32.mrb[0].mxu0
        %999 = vmatprep.mubr.f32.mxu0 0.0
        %1000 = vmatmul.mubr.f32.gmra.mrb[0].mxu0 %v861
        %v1001 = vpop.f32.mrb[0].mxu0
        %v1002 = vadd.f32 0.0, %v1001
        %v1003 = vpop.f32.mrb[0].mxu0
        %1004 = vmatprep.mubr.f32.mxu0 0.0
        %1005 = vmatmul.mubr.f32.gmra.mrb[0].mxu0 %v864
        %v1006 = vpop.f32.mrb[0].mxu0
        %v1007 = vadd.f32 0.0, %v1006
        %v1008 = vpop.f32.mrb[0].mxu0
        %1009 = vmatprep.mubr.f32.mxu0 0.0
        %1010 = vmatmul.mubr.f32.gmra.mrb[0].mxu0 %v867
        %v1011 = vpop.f32.mrb[0].mxu0
        %v1012 = vadd.f32 0.0, %v1011
        %v1013 = vpop.f32.mrb[0].mxu0
        %1014 = vmatprep.mubr.f32.mxu0 0.0
        %1015 = vmatmul.mubr.f32.gmra.mrb[0].mxu0 %v870
        %v1016 = vpop.f32.mrb[0].mxu0
        %v1017 = vadd.f32 0.0, %v1016
        %v1018 = vpop.f32.mrb[0].mxu0
        %1019 = vdwg.mxu0
        %1020 = vmatprep.subr.mxu0 0.0
        %1021 = vmatpush1.xpose.msra.mxu0 %v825
        %1022 = vmatprep.subr.mxu0 0.0
        %1023 = vmatpush1.xpose.msra.mxu0 %v828
        %1024 = vmatprep.subr.mxu0 0.0
        %1025 = vmatpush1.xpose.msra.mxu0 %v831
        %1026 = vmatprep.subr.mxu0 0.0
        %1027 = vmatpush1.xpose.msra.mxu0 %v834
        %1028 = vmatprep.subr.mxu0 0.0
        %1029 = vmatpush1.xpose.msra.mxu0 %v837
        %1030 = vmatprep.subr.mxu0 0.0
        %1031 = vmatpush1.xpose.msra.mxu0 %v840
        %1032 = vmatprep.subr.mxu0 0.0
        %1033 = vmatpush1.xpose.msra.mxu0 %v843
        %1034 = vmatprep.subr.mxu0 0.0
        %1035 = vmatpush1.xpose.msra.mxu0 %v846
        %1036 = vmatprep.subr.mxu0 0.0
        %1037 = vmatpush1.xpose.msra.mxu0 %v849
        %1038 = vmatprep.subr.mxu0 0.0
        %1039 = vmatpush1.xpose.msra.mxu0 %v852
        %1040 = vmatprep.subr.mxu0 0.0
        %1041 = vmatpush1.xpose.msra.mxu0 %v855
        %1042 = vmatprep.subr.mxu0 0.0
        %1043 = vmatpush1.xpose.msra.mxu0 %v858
        %1044 = vmatprep.subr.mxu0 0.0
        %1045 = vmatpush1.xpose.msra.mxu0 %v861
        %1046 = vmatprep.subr.mxu0 0.0
        %1047 = vmatpush1.xpose.msra.mxu0 %v864
        %1048 = vmatprep.subr.mxu0 0.0
        %1049 = vmatpush1.xpose.msra.mxu0 %v867
        %1050 = vmatprep.subr.mxu0 0.0
        %1051 = vmatpush1.xpose.msra.mxu0 %v870
        %1052 = vmatprep.subr.mxu0 0.0
        %1053 = vmatpush1.xpose.msra.mxu0 0.0
        %1054 = vmatprep.subr.mxu0 0.0
        %1055 = vmatpush1.xpose.msra.mxu0 0.0
        %1056 = vmatprep.subr.mxu0 0.0
        %1057 = vmatpush1.xpose.msra.mxu0 0.0
        %1058 = vmatprep.subr.mxu0 0.0
        %1059 = vmatpush1.xpose.msra.mxu0 0.0
        %1060 = vmatprep.subr.mxu0 0.0
        %1061 = vmatpush1.xpose.msra.mxu0 0.0
        %1062 = vmatprep.subr.mxu0 0.0
        %1063 = vmatpush1.xpose.msra.mxu0 0.0
        %1064 = vmatprep.subr.mxu0 0.0
        %1065 = vmatpush1.xpose.msra.mxu0 0.0
        %1066 = vmatprep.subr.mxu0 0.0
        %1067 = vmatpush1.xpose.msra.mxu0 0.0
        %1068 = vmatprep.subr.mxu0 0.0
        %1069 = vmatpush1.xpose.msra.mxu0 0.0
        %1070 = vmatprep.subr.mxu0 0.0
        %1071 = vmatpush1.xpose.msra.mxu0 0.0
        %1072 = vmatprep.subr.mxu0 0.0
        %1073 = vmatpush1.xpose.msra.mxu0 0.0
        %1074 = vmatprep.subr.mxu0 0.0
        %1075 = vmatpush1.xpose.msra.mxu0 0.0
        %1076 = vmatprep.subr.mxu0 0.0
        %1077 = vmatpush1.xpose.msra.mxu0 0.0
        %1078 = vmatprep.subr.mxu0 0.0
        %1079 = vmatpush1.xpose.msra.mxu0 0.0
        %1080 = vmatprep.subr.mxu0 0.0
        %1081 = vmatpush1.xpose.msra.mxu0 0.0
        %1082 = vmatprep.subr.mxu0 0.0
        %1083 = vmatpush1.xpose.msra.mxu0 0.0
        %1084 = vmatprep.mubr.f32.mxu0 0.0
        %1085 = vmatmul.mubr.f32.gmra.mrb[0].mxu0 %v873
        %v1086 = vpop.f32.mrb[0].mxu0
        %v1087 = vadd.f32 0.0, %v1086
        %v1088 = vpop.f32.mrb[0].mxu0
        %1089 = vdwg.mxu0
        %s1090 = sld [smem:[#allocation2]]
        %v1091 = vstv %s1090
        %v1092 = vadd.f32 %v942, %v1091
        %v1093 = vadd.f32 %v947, %v1091
        %v1094 = vadd.f32 %v952, %v1091
        %v1095 = vadd.f32 %v957, %v1091
        %v1096 = vadd.f32 %v962, %v1091
        %v1097 = vadd.f32 %v967, %v1091
        %v1098 = vadd.f32 %v972, %v1091
        %v1099 = vadd.f32 %v977, %v1091
        %v1100 = vadd.f32 %v982, %v1091
        %v1101 = vadd.f32 %v987, %v1091
        %v1102 = vadd.f32 %v992, %v1091
        %v1103 = vadd.f32 %v997, %v1091
        %v1104 = vadd.f32 %v1002, %v1091
        %v1105 = vadd.f32 %v1007, %v1091
        %v1106 = vadd.f32 %v1012, %v1091
        %v1107 = vadd.f32 %v1017, %v1091
        %vm1108 = vcmask 7168
        %1109 = vst.msk [vmem:[%s333] sm:$0xff] %vm1108, %v1092
        %1110 = vst.msk [vmem:[%s333 + $0x8] sm:$0xff] %vm1108, %v1093
        %1111 = vst.msk [vmem:[%s333 + $0x10] sm:$0xff] %vm1108, %v1094
        %1112 = vst.msk [vmem:[%s333 + $0x18] sm:$0xff] %vm1108, %v1095
        %1113 = vst.msk [vmem:[%s333 + $0x20] sm:$0xff] %vm1108, %v1096
        %1114 = vst.msk [vmem:[%s333 + $0x28] sm:$0xff] %vm1108, %v1097
        %1115 = vst.msk [vmem:[%s333 + $0x30] sm:$0xff] %vm1108, %v1098
        %1116 = vst.msk [vmem:[%s333 + $0x38] sm:$0xff] %vm1108, %v1099
        %1117 = vst.msk [vmem:[%s333 + $0x40] sm:$0xff] %vm1108, %v1100
        %1118 = vst.msk [vmem:[%s333 + $0x48] sm:$0xff] %vm1108, %v1101
        %1119 = vst.msk [vmem:[%s333 + $0x50] sm:$0xff] %vm1108, %v1102
        %1120 = vst.msk [vmem:[%s333 + $0x58] sm:$0xff] %vm1108, %v1103
        %1121 = vst.msk [vmem:[%s333 + $0x60] sm:$0xff] %vm1108, %v1104
        %1122 = vst.msk [vmem:[%s333 + $0x68] sm:$0xff] %vm1108, %v1105
        %1123 = vst.msk [vmem:[%s333 + $0x70] sm:$0xff] %vm1108, %v1106
        %1124 = vst.msk [vmem:[%s333 + $0x78] sm:$0xff] %vm1108, %v1107
        %1141 = vrot.lane.b32.xlu0 %v942, 125
        %v1142 = vpop.permute.xlu0 %1141
        %1143 = vrot.lane.b32.xlu0 %v947, 125
        %v1144 = vpop.permute.xlu0 %1143
        %1145 = vrot.lane.b32.xlu0 %v952, 125
        %v1146 = vpop.permute.xlu0 %1145
        %1147 = vrot.lane.b32.xlu0 %v957, 125
        %v1148 = vpop.permute.xlu0 %1147
        %1149 = vrot.lane.b32.xlu0 %v962, 125
        %v1150 = vpop.permute.xlu0 %1149
        %1151 = vrot.lane.b32.xlu0 %v967, 125
        %v1152 = vpop.permute.xlu0 %1151
        %1153 = vrot.lane.b32.xlu0 %v972, 125
        %v1154 = vpop.permute.xlu0 %1153
        %1155 = vrot.lane.b32.xlu0 %v977, 125
        %v1156 = vpop.permute.xlu0 %1155
        %1157 = vrot.lane.b32.xlu0 %v982, 125
        %v1158 = vpop.permute.xlu0 %1157
        %1159 = vrot.lane.b32.xlu0 %v987, 125
        %v1160 = vpop.permute.xlu0 %1159
        %1161 = vrot.lane.b32.xlu0 %v992, 125
        %v1162 = vpop.permute.xlu0 %1161
        %1163 = vrot.lane.b32.xlu0 %v997, 125
        %v1164 = vpop.permute.xlu0 %1163
        %1165 = vrot.lane.b32.xlu0 %v1002, 125
        %v1166 = vpop.permute.xlu0 %1165
        %1167 = vrot.lane.b32.xlu0 %v1007, 125
        %v1168 = vpop.permute.xlu0 %1167
        %1169 = vrot.lane.b32.xlu0 %v1012, 125
        %v1170 = vpop.permute.xlu0 %1169
        %1171 = vrot.lane.b32.xlu0 %v1017, 125
        %v1172 = vpop.permute.xlu0 %1171
        %1189 = vst.msk [vmem:[%s339] sm:$0xff] %vm1108, %v1142
        %1190 = vst.msk [vmem:[%s339 + $0x8] sm:$0xff] %vm1108, %v1144
        %1191 = vst.msk [vmem:[%s339 + $0x10] sm:$0xff] %vm1108, %v1146
        %1192 = vst.msk [vmem:[%s339 + $0x18] sm:$0xff] %vm1108, %v1148
        %1193 = vst.msk [vmem:[%s339 + $0x20] sm:$0xff] %vm1108, %v1150
        %1194 = vst.msk [vmem:[%s339 + $0x28] sm:$0xff] %vm1108, %v1152
        %1195 = vst.msk [vmem:[%s339 + $0x30] sm:$0xff] %vm1108, %v1154
        %1196 = vst.msk [vmem:[%s339 + $0x38] sm:$0xff] %vm1108, %v1156
        %1197 = vst.msk [vmem:[%s339 + $0x40] sm:$0xff] %vm1108, %v1158
        %1198 = vst.msk [vmem:[%s339 + $0x48] sm:$0xff] %vm1108, %v1160
        %1199 = vst.msk [vmem:[%s339 + $0x50] sm:$0xff] %vm1108, %v1162
        %1200 = vst.msk [vmem:[%s339 + $0x58] sm:$0xff] %vm1108, %v1164
        %1201 = vst.msk [vmem:[%s339 + $0x60] sm:$0xff] %vm1108, %v1166
        %1202 = vst.msk [vmem:[%s339 + $0x68] sm:$0xff] %vm1108, %v1168
        %1203 = vst.msk [vmem:[%s339 + $0x70] sm:$0xff] %vm1108, %v1170
        %1204 = vst.msk [vmem:[%s339 + $0x78] sm:$0xff] %vm1108, %v1172
        %1205 = vst [vmem:[%s303 - $0x1] sm:$0x2] %v1087
        %s1206 = sld [smem:[#allocation2 + $0x1]]
        %v1207 = vstv %s1206
        %v1208 = vadd.f32 %v1087, %v1207
        %1209 = vst [vmem:[%s309 - $0x2] sm:$0x4] %v1208
        %s1210 = smul.u32 16, %s26
        %p1211 = scmp.lt.s32.totalorder %s1210, 31
        %s1212 = scalar_select %p1211, %s1210, 31
        %s1213 = smul.addr %s1212, 4
        %s1214 = scalar_lea.vmem %s3, %s1213
        %s1215 = smul.u32 16, %s26
        %p1216 = scmp.lt.s32.totalorder %s1215, 31
        %s1217 = scalar_select %p1216, %s1215, 31
        %s1218 = smul.addr %s1217, 8
        %s1219 = scalar_lea.vmem %s4, %s1218
        %s1220 = sand.u32 %s154, 1
        %s1221 = scalar_lea.sflag [#allocation3], %s1220
        %s1222 = sand.u32 %s154, 1
        %s1223 = scalar_lea.vmem [#allocation5], %s1222
        %s1224 = sand.u32 %s180, 1
        %s1225 = scalar_lea.sflag [#allocation7], %s1224
        %s1226 = sand.u32 %s180, 1
        %s1227 = scalar_lea.vmem [#allocation6], %s1226
        %s1228 = smul.u32 16, %s26
        %p1229 = scmp.lt.s32.totalorder %s1228, 31
        %s1230 = scalar_select %p1229, %s1228, 31
        %s1231 = smul.addr %s1230, 8
        %s1232 = scalar_lea.vmem %s7, %s1231
        // Predicated region
        $region37: #{tpu_custom_call.1} parent=31 // pred_check
          %p1233 = pneg %p112
        $region38: #{tpu_custom_call.1} parent=31 // pred_check_branch
          %1235 = sbr.rel (%p1233) target = $region40
        $region39: #{tpu_custom_call.1} parent=31 // pred_region
          %s1236 = smul.u32 16, %s26
        $region40: #{tpu_custom_call.1} parent=31 // pred_fallthru
          _
        // Predicated region
        $region41: #{tpu_custom_call.1} parent=31 // pred_check
          %p1237 = pneg %p138
        $region42: #{tpu_custom_call.1} parent=31 // pred_check_branch
          %1239 = sbr.rel (%p1237) target = $region44
        $region43: #{tpu_custom_call.1} parent=31 // pred_region
          %s1240 = smul.u32 16, %s26
        $region44: #{tpu_custom_call.1} parent=31 // pred_fallthru
          _
        // Predicated region
        $region45: #{tpu_custom_call.1} parent=31 // pred_check
          %p1241 = pneg %p164
        $region46: #{tpu_custom_call.1} parent=31 // pred_check_branch
          %1243 = sbr.rel (%p1241) target = $region48
        $region47: #{tpu_custom_call.1} parent=31 // pred_region
          %s1245 = ssub.s32 16, 16
          %1246 = vsyncadd %s1221, %s1245
          %s1247 = smul.addr %s26, 16
          %s1248 = scalar_lea.hbm %s5, %s1247
          %s1250 = sshll.u32 %s1223, 4
          %s1251 = int_to_ptr.vmem [resolvable:$true] %s1250
          %1253 = dma.vmem_to_hbm [thread:$0]  %s1251, 16, %s1248, %s1221
        $region48: #{tpu_custom_call.1} parent=31 // pred_fallthru
          _
        // Predicated region
        $region49: #{tpu_custom_call.1} parent=31 // pred_check
          %p1254 = pneg %p190
        $region50: #{tpu_custom_call.1} parent=31 // pred_check_branch
          %1256 = sbr.rel (%p1254) target = $region52
        $region51: #{tpu_custom_call.1} parent=31 // pred_region
          %s1258 = ssub.s32 16, 16
          %1259 = vsyncadd %s1225, %s1258
          %s1260 = smul.addr %s26, 16
          %s1261 = scalar_lea.hbm %s6, %s1260
          %s1263 = sshll.u32 %s1227, 4
          %s1264 = int_to_ptr.vmem [resolvable:$true] %s1263
          %1266 = dma.vmem_to_hbm [thread:$0]  %s1264, 16, %s1261, %s1225
        $region52: #{tpu_custom_call.1} parent=31 // pred_fallthru
          _
        // Predicated region
        $region53: #{tpu_custom_call.1} parent=31 // pred_check
          %p1267 = pneg %p216
        $region54: #{tpu_custom_call.1} parent=31 // pred_check_branch
          %1269 = sbr.rel (%p1267) target = $region56
        $region55: #{tpu_custom_call.1} parent=31 // pred_region
          %s1270 = smul.u32 16, %s26
        $region56: #{tpu_custom_call.1} parent=31 // pred_fallthru
          _
      $region32: #{tpu_custom_call.1} parent=5 // pred_fallthru
        _
      %p1271 = scmp.le.s32.totalorder 2, %s21
      // Predicated region
      $region57: #{tpu_custom_call.1} parent=5 // pred_check
        %p1272 = pneg %p1271
      $region58: #{tpu_custom_call.1} parent=5 // pred_check_branch
        %1274 = sbr.rel (%p1272) target = $region60
      $region59: #{tpu_custom_call.1} parent=5 // pred_region
        %s1275 = ssub.s32 %s21, 2
        // Predicated region
        $region61: #{tpu_custom_call.1} parent=59 // pred_check
          %p1276 = pneg %p118
        $region62: #{tpu_custom_call.1} parent=59 // pred_check_branch
          %1278 = sbr.rel (%p1276) target = $region64
        $region63: #{tpu_custom_call.1} parent=59 // pred_region
          %s1279 = smul.u32 16, %s27
          %p1280 = scmp.lt.s32.totalorder %s1279, 31
          %s1281 = scalar_select %p1280, %s1279, 31
          %s1282 = smul.addr %s1281, 4
          %s1283 = scalar_lea.vmem %s3, %s1282
        $region64: #{tpu_custom_call.1} parent=59 // pred_fallthru
          _
        // Predicated region
        $region65: #{tpu_custom_call.1} parent=59 // pred_check
          %p1284 = pneg %p144
        $region66: #{tpu_custom_call.1} parent=59 // pred_check_branch
          %1286 = sbr.rel (%p1284) target = $region68
        $region67: #{tpu_custom_call.1} parent=59 // pred_region
          %s1287 = smul.u32 16, %s27
          %p1288 = scmp.lt.s32.totalorder %s1287, 31
          %s1289 = scalar_select %p1288, %s1287, 31
          %s1290 = smul.addr %s1289, 8
          %s1291 = scalar_lea.vmem %s4, %s1290
        $region68: #{tpu_custom_call.1} parent=59 // pred_fallthru
          _
        // Predicated region
        $region69: #{tpu_custom_call.1} parent=59 // pred_check
          %p1292 = pneg %p170
        $region70: #{tpu_custom_call.1} parent=59 // pred_check_branch
          %1294 = sbr.rel (%p1292) target = $region72
        $region71: #{tpu_custom_call.1} parent=59 // pred_region
          %s1295 = sand.u32 %s155, 1
          %s1296 = scalar_lea.sflag [#allocation3], %s1295
          %s1297 = sand.u32 %s155, 1
          %s1298 = scalar_lea.vmem [#allocation5], %s1297
          %1299 = dma.done %s1296, 16
        $region72: #{tpu_custom_call.1} parent=59 // pred_fallthru
          _
        // Predicated region
        $region73: #{tpu_custom_call.1} parent=59 // pred_check
          %p1300 = pneg %p196
        $region74: #{tpu_custom_call.1} parent=59 // pred_check_branch
          %1302 = sbr.rel (%p1300) target = $region76
        $region75: #{tpu_custom_call.1} parent=59 // pred_region
          %s1303 = sand.u32 %s181, 1
          %s1304 = scalar_lea.sflag [#allocation7], %s1303
          %s1305 = sand.u32 %s181, 1
          %s1306 = scalar_lea.vmem [#allocation6], %s1305
          %1307 = dma.done %s1304, 16
        $region76: #{tpu_custom_call.1} parent=59 // pred_fallthru
          _
        // Predicated region
        $region77: #{tpu_custom_call.1} parent=59 // pred_check
          %p1308 = pneg %p222
        $region78: #{tpu_custom_call.1} parent=59 // pred_check_branch
          %1310 = sbr.rel (%p1308) target = $region80
        $region79: #{tpu_custom_call.1} parent=59 // pred_region
          %s1311 = smul.u32 16, %s27
          %p1312 = scmp.lt.s32.totalorder %s1311, 31
          %s1313 = scalar_select %p1312, %s1311, 31
          %s1314 = smul.addr %s1313, 8
          %s1315 = scalar_lea.vmem %s7, %s1314
        $region80: #{tpu_custom_call.1} parent=59 // pred_fallthru
          _
      $region60: #{tpu_custom_call.1} parent=5 // pred_fallthru
        _
    $region6: #{tpu_custom_call.1} parent=1 // loop_footer
      %s25 = sadd.s32 1, %s21
    $region7: #{tpu_custom_call.1} parent=1 // loop_footer_branch
      %20 = sbr.rel target = $region3
    $region8: #{tpu_custom_call.1} parent=1 // loop_exit
      _
    %1316 = vsyncpa [#allocation3], 1
    %s1317 = scalar_lea.sflag [#allocation3], 1
    %1318 = vsyncpa %s1317, 1
    %1319 = vsyncpa [#allocation7], 1
    %s1320 = scalar_lea.sflag [#allocation7], 1
    %1321 = vsyncpa %s1320, 1
    %1322 = vsyncpa [#allocation4], 1
    %s1323 = scalar_lea.sflag [#allocation4], 1
    %1324 = vsyncpa %s1323, 1

</llo_original>
